<compile_context>
chip_gen: v7x
topology: tpu7x:2x2x1
jax: 0.10.0
libtpu: 0.0.40
codegen_flags: <defaults>
</compile_context>

<pallas_src>
import functools
import math

import jax
import jax.numpy as jnp
from jax.experimental import pallas as pl
from jax.experimental.pallas import tpu as pltpu


# ----------------------------- fused Pallas kernel -----------------------------

def _fused_kernel(x_ref, w1_ref, b1_ref, w2_ref, b2_ref,
                  we_ref, be_ref, wd_ref, bd_ref,
                  wdc1_ref, bdc1_ref, wdc2_ref, bdc2_ref,
                  o_ref,
                  xpad, h1pad, h2s, d0pad, uppad,
                  *, L, Lh, K):
    """One batch element, channels-last (sequence on sublanes, channels on lanes).

    x_ref:   (L, 1)          o_ref: (L, 1)
    w1:(K,32) b1:(1,32)  w2:(K*32,64) b2:(1,64)
    we:(Lh,64,latent) be:(1,latent)  wd:(Lh,latent,64) bd:(Lh,64)
    wdc1:(K*64,32) bdc1:(1,32)  wdc2:(K*32,1) bdc2:(1,1)
    scratches: xpad (L+4,1), h1pad (L+4,32), h2s (L,64), d0pad (Lh+4,64), uppad (L+4,32)
    """
    pad = K // 2
    f32 = jnp.float32

    # ---- conv1: (L,1) -> (L,32), relu  (im2col -> one dot) ----
    xpad[...] = jnp.zeros(xpad.shape, f32)
    xpad[pl.ds(pad, L), :] = x_ref[...]
    p1 = jnp.concatenate([xpad[pl.ds(k, L), :] for k in range(K)], axis=1)       # (L, K)
    h1 = jnp.maximum(
        jnp.dot(p1, w1_ref[...], preferred_element_type=f32) + b1_ref[...], 0.0)  # (L, 32)

    # ---- conv2: (L,32) -> (L,64), relu ----
    h1pad[...] = jnp.zeros(h1pad.shape, f32)
    h1pad[pl.ds(pad, L), :] = h1
    p2 = jnp.concatenate([h1pad[pl.ds(k, L), :] for k in range(K)], axis=1)      # (L, K*32)
    h2 = jnp.maximum(
        jnp.dot(p2, w2_ref[...], preferred_element_type=f32) + b2_ref[...], 0.0)  # (L, 64)

    # ---- MaxPool1d(2,2): strided loads, one maximum ----
    h2s[...] = h2
    pooled = jnp.maximum(h2s[pl.ds(0, Lh, 2), :], h2s[pl.ds(1, Lh, 2), :])       # (Lh, 64)

    # ---- encoder FC (torch's channel-major flatten is folded into the weight layout) ----
    z = be_ref[...]                                                               # (1, latent)
    for p in range(Lh):
        z = z + jnp.dot(pooled[p:p + 1, :], we_ref[p], preferred_element_type=f32)

    # ---- decoder FC -> (Lh, 64) channels-last (no activation on the latent, as in torch) ----
    d0 = jnp.concatenate(
        [jnp.dot(z, wd_ref[p], preferred_element_type=f32) for p in range(Lh)],
        axis=0) + bd_ref[...]                                                     # (Lh, 64)

    # ---- deconv1 (ConvTranspose1d s=1 p=2 k=5 == same-conv with flipped kernel), relu ----
    d0pad[...] = jnp.zeros(d0pad.shape, f32)
    d0pad[pl.ds(pad, Lh), :] = d0
    p3 = jnp.concatenate([d0pad[pl.ds(k, Lh), :] for k in range(K)], axis=1)     # (Lh, K*64)
    d1 = jnp.maximum(
        jnp.dot(p3, wdc1_ref[...], preferred_element_type=f32) + bdc1_ref[...], 0.0)  # (Lh, 32)

    # ---- nearest 2x upsample fused into deconv2's padded input (two strided stores) ----
    uppad[...] = jnp.zeros(uppad.shape, f32)
    uppad[pl.ds(pad, Lh, 2), :] = d1
    uppad[pl.ds(pad + 1, Lh, 2), :] = d1

    # ---- deconv2 + sigmoid: (L,32) -> (L,1) ----
    p4 = jnp.concatenate([uppad[pl.ds(k, L), :] for k in range(K)], axis=1)      # (L, K*32)
    y = jnp.dot(p4, wdc2_ref[...], preferred_element_type=f32) + bdc2_ref[...]   # (L, 1)
    o_ref[...] = jax.nn.sigmoid(y).astype(o_ref.dtype)


# ----------------------------- forward wrapper -----------------------------

@functools.partial(jax.jit, static_argnums=(2,))
def gencoder_autoencoder_forward(x, kparams, input_length):
    """x: (B, 1, L) float32 (PyTorch NCL). Returns (B, 1, L)."""
    B = x.shape[0]
    L = input_length
    Lh = L // 2
    K = 5
    latent = kparams["be"].shape[1]

    # (B,1,L) -> (B,L,1) is the same linear order: a free reshape, not a transpose.
    x_cl = x.reshape(B, L, 1)

    kern = functools.partial(_fused_kernel, L=L, Lh=Lh, K=K)
    y_cl = pl.pallas_call(
        kern,
        out_shape=jax.ShapeDtypeStruct((B, L, 1), jnp.float32),
        grid=(B,),
        in_specs=[
            pl.BlockSpec((None, L, 1), lambda b: (b, 0, 0)),          # x (per batch)
            pl.BlockSpec((K, 32), lambda b: (0, 0)),                  # w1
            pl.BlockSpec((1, 32), lambda b: (0, 0)),                  # b1
            pl.BlockSpec((K * 32, 64), lambda b: (0, 0)),             # w2
            pl.BlockSpec((1, 64), lambda b: (0, 0)),                  # b2
            pl.BlockSpec((Lh, 64, latent), lambda b: (0, 0, 0)),      # enc fc weight
            pl.BlockSpec((1, latent), lambda b: (0, 0)),              # enc fc bias
            pl.BlockSpec((Lh, latent, 64), lambda b: (0, 0, 0)),      # dec fc weight
            pl.BlockSpec((Lh, 64), lambda b: (0, 0)),                 # dec fc bias
            pl.BlockSpec((K * 64, 32), lambda b: (0, 0)),             # deconv1
            pl.BlockSpec((1, 32), lambda b: (0, 0)),
            pl.BlockSpec((K * 32, 1), lambda b: (0, 0)),              # deconv2
            pl.BlockSpec((1, 1), lambda b: (0, 0)),
        ],
        out_specs=pl.BlockSpec((None, L, 1), lambda b: (b, 0, 0)),
        scratch_shapes=[
            pltpu.VMEM((L + 4, 1), jnp.float32),     # padded conv1 input
            pltpu.VMEM((L + 4, 32), jnp.float32),    # padded conv2 input
            pltpu.VMEM((L, 64), jnp.float32),        # conv2 output (for strided pooling)
            pltpu.VMEM((Lh + 4, 64), jnp.float32),   # padded deconv1 input
            pltpu.VMEM((L + 4, 32), jnp.float32),    # padded upsampled deconv2 input
        ],
        compiler_params=pltpu.CompilerParams(
            dimension_semantics=("parallel",)),      # v7x: one batch element per TensorCore
    )(x_cl, kparams["w1f"], kparams["b1"], kparams["w2f"], kparams["b2"],
      kparams["we"], kparams["be"], kparams["wd"], kparams["bd"],
      kparams["wdc1"], kparams["bdc1"], kparams["wdc2"], kparams["bdc2"])

    # (B,L,1) -> (B,1,L): same linear order, free reshape.
    return y_cl.reshape(B, 1, L)


# ----------------------------- params: init + one-time preprocessing -----------------------------

def init_params(key, input_length, latent_dim):
    """Deterministic init; same parameter shapes as the PyTorch module."""
    Lh = input_length // 2
    ks = jax.random.split(key, 12)

    def u(k, shape, fan_in):
        bound = 1.0 / math.sqrt(fan_in)
        return jax.random.uniform(k, shape, jnp.float32, -bound, bound)

    return dict(
        conv1_w=u(ks[0], (32, 1, 5), 1 * 5),        conv1_b=u(ks[1], (32,), 1 * 5),
        conv2_w=u(ks[2], (64, 32, 5), 32 * 5),      conv2_b=u(ks[3], (64,), 32 * 5),
        enc_fc_w=u(ks[4], (latent_dim, 64 * Lh), 64 * Lh),
        enc_fc_b=u(ks[5], (latent_dim,), 64 * Lh),
        dec_fc_w=u(ks[6], (Lh * 64, latent_dim), latent_dim),
        dec_fc_b=u(ks[7], (Lh * 64,), latent_dim),
        deconv1_w=u(ks[8], (64, 32, 5), 64 * 5),    deconv1_b=u(ks[9], (32,), 64 * 5),
        deconv2_w=u(ks[10], (32, 1, 5), 32 * 5),    deconv2_b=u(ks[11], (1,), 32 * 5),
    )


def prepare_params(params, input_length):
    """One-time weight preprocessing (hoisted out of the forward).

    - conv weights -> flattened (K*Cin, Cout) im2col form.
    - ConvTranspose1d(stride=1, pad=2) -> same-conv with flipped kernel, in/out swapped.
    - FC weights re-ordered so the in-kernel (seq, channel) layout matches torch's
      channel-major .view() flatten exactly.
    """
    Lh = input_length // 2
    latent = params["enc_fc_b"].shape[0]
    K = 5

    w1f = jnp.transpose(params["conv1_w"], (2, 1, 0)).reshape(K * 1, 32)      # (K*1, 32)
    w2f = jnp.transpose(params["conv2_w"], (2, 1, 0)).reshape(K * 32, 64)     # (K*32, 64)

    # enc_fc_w[j, c*Lh + p]  ->  we[p, c, j]
    we = jnp.transpose(params["enc_fc_w"].reshape(latent, 64, Lh), (2, 1, 0))
    # dec_fc_w[c*Lh + p, j]  ->  wd[p, j, c];  dec_fc_b[c*Lh + p] -> bd[p, c]
    wd = jnp.transpose(params["dec_fc_w"].reshape(64, Lh, latent), (1, 2, 0))
    bd = params["dec_fc_b"].reshape(64, Lh).T

    wdc1 = jnp.transpose(params["deconv1_w"][:, :, ::-1], (2, 0, 1)).reshape(K * 64, 32)
    wdc2 = jnp.transpose(params["deconv2_w"][:, :, ::-1], (2, 0, 1)).reshape(K * 32, 1)

    return dict(
        w1f=w1f, b1=params["conv1_b"].reshape(1, 32),
        w2f=w2f, b2=params["conv2_b"].reshape(1, 64),
        we=we, be=params["enc_fc_b"].reshape(1, latent),
        wd=wd, bd=bd,
        wdc1=wdc1, bdc1=params["deconv1_b"].reshape(1, 32),
        wdc2=wdc2, bdc2=params["deconv2_b"].reshape(1, 1),
    )


# ----------------------------- pure-JAX reference (verification) -----------------------------

def reference_forward(x, params, input_length):
    L = input_length
    Lh = L // 2
    dn = ("NCH", "OIH", "NCH")
    B = x.shape[0]

    h = jax.lax.conv_general_dilated(x, params["conv1_w"], (1,), [(2, 2)], dimension_numbers=dn)
    h = jax.nn.relu(h + params["conv1_b"][None, :, None])
    h = jax.lax.conv_general_dilated(h, params["conv2_w"], (1,), [(2, 2)], dimension_numbers=dn)
    h = jax.nn.relu(h + params["conv2_b"][None, :, None])
    h = jax.lax.reduce_window(h, -jnp.inf, jax.lax.max, (1, 1, 2), (1, 1, 2), "VALID")

    hf = h.reshape(B, -1)
    z = hf @ params["enc_fc_w"].T + params["enc_fc_b"]
    d = z @ params["dec_fc_w"].T + params["dec_fc_b"]
    d = d.reshape(B, 64, Lh)

    wd1 = jnp.transpose(params["deconv1_w"][:, :, ::-1], (1, 0, 2))  # (32, 64, 5) OIH
    d = jax.lax.conv_general_dilated(d, wd1, (1,), [(2, 2)], dimension_numbers=dn)
    d = jax.nn.relu(d + params["deconv1_b"][None, :, None])
    d = jnp.repeat(d, 2, axis=2)                                     # nearest upsample to L
    wd2 = jnp.transpose(params["deconv2_w"][:, :, ::-1], (1, 0, 2))  # (1, 32, 5)
    d = jax.lax.conv_general_dilated(d, wd2, (1,), [(2, 2)], dimension_numbers=dn)
    return jax.nn.sigmoid(d + params["deconv2_b"][None, :, None])


# ----------------------------- main -----------------------------

if __name__ == "__main__":
    B, INPUT_LEN, LATENT = 2, 16, 8
    key = jax.random.PRNGKey(0)
    pkey, xkey = jax.random.split(key)

    params = init_params(pkey, INPUT_LEN, LATENT)
    kparams = prepare_params(params, INPUT_LEN)     # hoisted, runs once
    x = jax.random.uniform(xkey, (B, 1, INPUT_LEN), jnp.float32)   # PyTorch Conv1d NCL input

    y = gencoder_autoencoder_forward(x, kparams, INPUT_LEN)
    y = jax.block_until_ready(y)

    assert y.shape == (B, 1, INPUT_LEN) and y.dtype == jnp.float32

    y_ref = reference_forward(x, params, INPUT_LEN)
    max_err = float(jnp.max(jnp.abs(y - y_ref)))
    assert jnp.allclose(y, y_ref, atol=2e-3, rtol=2e-3), f"max_err={max_err}"

    print("KERNEL_OK")
</pallas_src>

<mosaic_0001>
module attributes {stable_mosaic.version = 11 : i64} {
  func.func @_fused_kernel(%arg0: i32, %arg1: memref<1x16x1xf32, #tpu.memory_space<vmem>>, %arg2: memref<5x32xf32, #tpu.memory_space<vmem>>, %arg3: memref<1x32xf32, #tpu.memory_space<vmem>>, %arg4: memref<160x64xf32, #tpu.memory_space<vmem>>, %arg5: memref<1x64xf32, #tpu.memory_space<vmem>>, %arg6: memref<8x64x8xf32, #tpu.memory_space<vmem>>, %arg7: memref<1x8xf32, #tpu.memory_space<vmem>>, %arg8: memref<8x8x64xf32, #tpu.memory_space<vmem>>, %arg9: memref<8x64xf32, #tpu.memory_space<vmem>>, %arg10: memref<320x32xf32, #tpu.memory_space<vmem>>, %arg11: memref<1x32xf32, #tpu.memory_space<vmem>>, %arg12: memref<160x1xf32, #tpu.memory_space<vmem>>, %arg13: memref<1x1xf32, #tpu.memory_space<vmem>>, %arg14: memref<1x16x1xf32, #tpu.memory_space<vmem>>, %arg15: memref<20x1xf32, #tpu.memory_space<vmem>>, %arg16: memref<20x32xf32, #tpu.memory_space<vmem>>, %arg17: memref<16x64xf32, #tpu.memory_space<vmem>>, %arg18: memref<12x64xf32, #tpu.memory_space<vmem>>, %arg19: memref<20x32xf32, #tpu.memory_space<vmem>>) attributes {dimension_semantics = [#tpu.dimension_semantics<parallel>], iteration_bounds = array<i64: 2>, scalar_prefetch = 0 : i64, scratch_operands = 5 : i64, tpu.core_type = #tpu.core_type<tc>, window_params = [{transform_indices = @transform_0, window_bounds = array<i64: 1, 16, 1>}, {pipeline_mode = #tpu.pipeline_mode<synchronous>, transform_indices = @transform_1, window_bounds = array<i64: 5, 32>}, {pipeline_mode = #tpu.pipeline_mode<synchronous>, transform_indices = @transform_2, window_bounds = array<i64: 1, 32>}, {pipeline_mode = #tpu.pipeline_mode<synchronous>, transform_indices = @transform_3, window_bounds = array<i64: 160, 64>}, {pipeline_mode = #tpu.pipeline_mode<synchronous>, transform_indices = @transform_4, window_bounds = array<i64: 1, 64>}, {pipeline_mode = #tpu.pipeline_mode<synchronous>, transform_indices = @transform_5, window_bounds = array<i64: 8, 64, 8>}, {pipeline_mode = #tpu.pipeline_mode<synchronous>, transform_indices = @transform_6, window_bounds = array<i64: 1, 8>}, {pipeline_mode = #tpu.pipeline_mode<synchronous>, transform_indices = @transform_7, window_bounds = array<i64: 8, 8, 64>}, {pipeline_mode = #tpu.pipeline_mode<synchronous>, transform_indices = @transform_8, window_bounds = array<i64: 8, 64>}, {pipeline_mode = #tpu.pipeline_mode<synchronous>, transform_indices = @transform_9, window_bounds = array<i64: 320, 32>}, {pipeline_mode = #tpu.pipeline_mode<synchronous>, transform_indices = @transform_10, window_bounds = array<i64: 1, 32>}, {pipeline_mode = #tpu.pipeline_mode<synchronous>, transform_indices = @transform_11, window_bounds = array<i64: 160, 1>}, {pipeline_mode = #tpu.pipeline_mode<synchronous>, transform_indices = @transform_12, window_bounds = array<i64: 1, 1>}, {transform_indices = @transform_13, window_bounds = array<i64: 1, 16, 1>}]} {
    %cst = arith.constant 0.000000e+00 : f32
    %0 = vector.broadcast %cst : f32 to vector<20x1xf32>
    %c0 = arith.constant 0 : index
    %c0_0 = arith.constant 0 : index
    %1 = vector.load %arg15[%c0, %c0_0] : memref<20x1xf32, #tpu.memory_space<vmem>>, vector<20x1xf32>
    tpu.vector_store %arg15[%c0, %c0_0], %0 {strides = array<i32>} : memref<20x1xf32, #tpu.memory_space<vmem>>, vector<20x1xf32>,
    %c0_1 = arith.constant 0 : index
    %c0_2 = arith.constant 0 : index
    %c0_3 = arith.constant 0 : index
    %2 = vector.load %arg1[%c0_1, %c0_2, %c0_3] : memref<1x16x1xf32, #tpu.memory_space<vmem>>, vector<1x16x1xf32>
    %3 = vector.shape_cast %2 : vector<1x16x1xf32> to vector<16x1xf32>
    %c2 = arith.constant 2 : index
    %c0_4 = arith.constant 0 : index
    %4 = vector.load %arg15[%c2, %c0_4] : memref<20x1xf32, #tpu.memory_space<vmem>>, vector<16x1xf32>
    tpu.vector_store %arg15[%c2, %c0_4], %3 {strides = array<i32>} : memref<20x1xf32, #tpu.memory_space<vmem>>, vector<16x1xf32>,
    %c0_5 = arith.constant 0 : index
    %c0_6 = arith.constant 0 : index
    %5 = vector.load %arg15[%c0_5, %c0_6] : memref<20x1xf32, #tpu.memory_space<vmem>>, vector<16x1xf32>
    %c1 = arith.constant 1 : index
    %c0_7 = arith.constant 0 : index
    %6 = vector.load %arg15[%c1, %c0_7] : memref<20x1xf32, #tpu.memory_space<vmem>>, vector<16x1xf32>
    %c2_8 = arith.constant 2 : index
    %c0_9 = arith.constant 0 : index
    %7 = vector.load %arg15[%c2_8, %c0_9] : memref<20x1xf32, #tpu.memory_space<vmem>>, vector<16x1xf32>
    %c3 = arith.constant 3 : index
    %c0_10 = arith.constant 0 : index
    %8 = vector.load %arg15[%c3, %c0_10] : memref<20x1xf32, #tpu.memory_space<vmem>>, vector<16x1xf32>
    %c4 = arith.constant 4 : index
    %c0_11 = arith.constant 0 : index
    %9 = vector.load %arg15[%c4, %c0_11] : memref<20x1xf32, #tpu.memory_space<vmem>>, vector<16x1xf32>
    %10 = tpu.concatenate %5, %6, %7, %8, %9 in 1 : vector<16x1xf32>, vector<16x1xf32>, vector<16x1xf32>, vector<16x1xf32>, vector<16x1xf32> -> vector<16x5xf32>
    %c0_12 = arith.constant 0 : index
    %c0_13 = arith.constant 0 : index
    %11 = vector.load %arg2[%c0_12, %c0_13] : memref<5x32xf32, #tpu.memory_space<vmem>>, vector<5x32xf32>
    %cst_14 = arith.constant dense<0.000000e+00> : vector<16x32xf32>
    %12 = tpu.matmul %10, %11, %cst_14 {dimension_numbers = #tpu.dot_dimension_numbers<[1], [0], [0], [1], [0, 0, 1, 1], [], []>} : vector<16x5xf32>, vector<5x32xf32>, vector<16x32xf32> -> vector<16x32xf32>
    %c0_15 = arith.constant 0 : index
    %c0_16 = arith.constant 0 : index
    %13 = vector.load %arg3[%c0_15, %c0_16] : memref<1x32xf32, #tpu.memory_space<vmem>>, vector<1x32xf32>
    %14 = vector.broadcast %13 : vector<1x32xf32> to vector<16x32xf32>
    %15 = arith.addf %12, %14 : vector<16x32xf32>
    %cst_17 = arith.constant 0.000000e+00 : f32
    %16 = vector.broadcast %cst_17 : f32 to vector<16x32xf32>
    %17 = arith.maximumf %15, %16 : vector<16x32xf32>
    %cst_18 = arith.constant 0.000000e+00 : f32
    %18 = vector.broadcast %cst_18 : f32 to vector<20x32xf32>
    %c0_19 = arith.constant 0 : index
    %c0_20 = arith.constant 0 : index
    %19 = vector.load %arg16[%c0_19, %c0_20] : memref<20x32xf32, #tpu.memory_space<vmem>>, vector<20x32xf32>
    tpu.vector_store %arg16[%c0_19, %c0_20], %18 {strides = array<i32>} : memref<20x32xf32, #tpu.memory_space<vmem>>, vector<20x32xf32>,
    %c2_21 = arith.constant 2 : index
    %c0_22 = arith.constant 0 : index
    %20 = vector.load %arg16[%c2_21, %c0_22] : memref<20x32xf32, #tpu.memory_space<vmem>>, vector<16x32xf32>
    tpu.vector_store %arg16[%c2_21, %c0_22], %17 {strides = array<i32>} : memref<20x32xf32, #tpu.memory_space<vmem>>, vector<16x32xf32>,
    %c0_23 = arith.constant 0 : index
    %c0_24 = arith.constant 0 : index
    %21 = vector.load %arg16[%c0_23, %c0_24] : memref<20x32xf32, #tpu.memory_space<vmem>>, vector<16x32xf32>
    %c1_25 = arith.constant 1 : index
    %c0_26 = arith.constant 0 : index
    %22 = vector.load %arg16[%c1_25, %c0_26] : memref<20x32xf32, #tpu.memory_space<vmem>>, vector<16x32xf32>
    %c2_27 = arith.constant 2 : index
    %c0_28 = arith.constant 0 : index
    %23 = vector.load %arg16[%c2_27, %c0_28] : memref<20x32xf32, #tpu.memory_space<vmem>>, vector<16x32xf32>
    %c3_29 = arith.constant 3 : index
    %c0_30 = arith.constant 0 : index
    %24 = vector.load %arg16[%c3_29, %c0_30] : memref<20x32xf32, #tpu.memory_space<vmem>>, vector<16x32xf32>
    %c4_31 = arith.constant 4 : index
    %c0_32 = arith.constant 0 : index
    %25 = vector.load %arg16[%c4_31, %c0_32] : memref<20x32xf32, #tpu.memory_space<vmem>>, vector<16x32xf32>
    %26 = tpu.concatenate %21, %22, %23, %24, %25 in 1 : vector<16x32xf32>, vector<16x32xf32>, vector<16x32xf32>, vector<16x32xf32>, vector<16x32xf32> -> vector<16x160xf32>
    %c0_33 = arith.constant 0 : index
    %c0_34 = arith.constant 0 : index
    %27 = vector.load %arg4[%c0_33, %c0_34] : memref<160x64xf32, #tpu.memory_space<vmem>>, vector<160x64xf32>
    %cst_35 = arith.constant dense<0.000000e+00> : vector<16x64xf32>
    %28 = tpu.matmul %26, %27, %cst_35 {dimension_numbers = #tpu.dot_dimension_numbers<[1], [0], [0], [1], [0, 0, 1, 1], [], []>} : vector<16x160xf32>, vector<160x64xf32>, vector<16x64xf32> -> vector<16x64xf32>
    %c0_36 = arith.constant 0 : index
    %c0_37 = arith.constant 0 : index
    %29 = vector.load %arg5[%c0_36, %c0_37] : memref<1x64xf32, #tpu.memory_space<vmem>>, vector<1x64xf32>
    %30 = vector.broadcast %29 : vector<1x64xf32> to vector<16x64xf32>
    %31 = arith.addf %28, %30 : vector<16x64xf32>
    %cst_38 = arith.constant 0.000000e+00 : f32
    %32 = vector.broadcast %cst_38 : f32 to vector<16x64xf32>
    %33 = arith.maximumf %31, %32 : vector<16x64xf32>
    %c0_39 = arith.constant 0 : index
    %c0_40 = arith.constant 0 : index
    %34 = vector.load %arg17[%c0_39, %c0_40] : memref<16x64xf32, #tpu.memory_space<vmem>>, vector<16x64xf32>
    tpu.vector_store %arg17[%c0_39, %c0_40], %33 {strides = array<i32>} : memref<16x64xf32, #tpu.memory_space<vmem>>, vector<16x64xf32>,
    %c0_41 = arith.constant 0 : index
    %c0_42 = arith.constant 0 : index
    %35 = tpu.strided_load %arg17[%c0_41, %c0_42] {strides = array<i32: 2, 1>} : memref<16x64xf32, #tpu.memory_space<vmem>>, vector<8x64xf32>
    %c1_43 = arith.constant 1 : index
    %c0_44 = arith.constant 0 : index
    %36 = tpu.strided_load %arg17[%c1_43, %c0_44] {strides = array<i32: 2, 1>} : memref<16x64xf32, #tpu.memory_space<vmem>>, vector<8x64xf32>
    %37 = arith.maximumf %35, %36 : vector<8x64xf32>
    %c0_45 = arith.constant 0 : index
    %c0_46 = arith.constant 0 : index
    %38 = vector.load %arg7[%c0_45, %c0_46] : memref<1x8xf32, #tpu.memory_space<vmem>>, vector<1x8xf32>
    %39 = vector.extract_strided_slice %37 {offsets = [0, 0], sizes = [1, 64], strides = [1, 1]} : vector<8x64xf32> to vector<1x64xf32>
    %c0_47 = arith.constant 0 : index
    %c0_48 = arith.constant 0 : index
    %c0_49 = arith.constant 0 : index
    %40 = vector.load %arg6[%c0_47, %c0_48, %c0_49] : memref<8x64x8xf32, #tpu.memory_space<vmem>>, vector<1x64x8xf32>
    %41 = vector.shape_cast %40 : vector<1x64x8xf32> to vector<64x8xf32>
    %cst_50 = arith.constant dense<0.000000e+00> : vector<1x8xf32>
    %42 = tpu.matmul %39, %41, %cst_50 {dimension_numbers = #tpu.dot_dimension_numbers<[1], [0], [0], [1], [0, 0, 1, 1], [], []>} : vector<1x64xf32>, vector<64x8xf32>, vector<1x8xf32> -> vector<1x8xf32>
    %43 = arith.addf %38, %42 : vector<1x8xf32>
    %44 = vector.extract_strided_slice %37 {offsets = [1, 0], sizes = [1, 64], strides = [1, 1]} : vector<8x64xf32> to vector<1x64xf32>
    %c1_51 = arith.constant 1 : index
    %c0_52 = arith.constant 0 : index
    %c0_53 = arith.constant 0 : index
    %45 = vector.load %arg6[%c1_51, %c0_52, %c0_53] : memref<8x64x8xf32, #tpu.memory_space<vmem>>, vector<1x64x8xf32>
    %46 = vector.shape_cast %45 : vector<1x64x8xf32> to vector<64x8xf32>
    %cst_54 = arith.constant dense<0.000000e+00> : vector<1x8xf32>
    %47 = tpu.matmul %44, %46, %cst_54 {dimension_numbers = #tpu.dot_dimension_numbers<[1], [0], [0], [1], [0, 0, 1, 1], [], []>} : vector<1x64xf32>, vector<64x8xf32>, vector<1x8xf32> -> vector<1x8xf32>
    %48 = arith.addf %43, %47 : vector<1x8xf32>
    %49 = vector.extract_strided_slice %37 {offsets = [2, 0], sizes = [1, 64], strides = [1, 1]} : vector<8x64xf32> to vector<1x64xf32>
    %c2_55 = arith.constant 2 : index
    %c0_56 = arith.constant 0 : index
    %c0_57 = arith.constant 0 : index
    %50 = vector.load %arg6[%c2_55, %c0_56, %c0_57] : memref<8x64x8xf32, #tpu.memory_space<vmem>>, vector<1x64x8xf32>
    %51 = vector.shape_cast %50 : vector<1x64x8xf32> to vector<64x8xf32>
    %cst_58 = arith.constant dense<0.000000e+00> : vector<1x8xf32>
    %52 = tpu.matmul %49, %51, %cst_58 {dimension_numbers = #tpu.dot_dimension_numbers<[1], [0], [0], [1], [0, 0, 1, 1], [], []>} : vector<1x64xf32>, vector<64x8xf32>, vector<1x8xf32> -> vector<1x8xf32>
    %53 = arith.addf %48, %52 : vector<1x8xf32>
    %54 = vector.extract_strided_slice %37 {offsets = [3, 0], sizes = [1, 64], strides = [1, 1]} : vector<8x64xf32> to vector<1x64xf32>
    %c3_59 = arith.constant 3 : index
    %c0_60 = arith.constant 0 : index
    %c0_61 = arith.constant 0 : index
    %55 = vector.load %arg6[%c3_59, %c0_60, %c0_61] : memref<8x64x8xf32, #tpu.memory_space<vmem>>, vector<1x64x8xf32>
    %56 = vector.shape_cast %55 : vector<1x64x8xf32> to vector<64x8xf32>
    %cst_62 = arith.constant dense<0.000000e+00> : vector<1x8xf32>
    %57 = tpu.matmul %54, %56, %cst_62 {dimension_numbers = #tpu.dot_dimension_numbers<[1], [0], [0], [1], [0, 0, 1, 1], [], []>} : vector<1x64xf32>, vector<64x8xf32>, vector<1x8xf32> -> vector<1x8xf32>
    %58 = arith.addf %53, %57 : vector<1x8xf32>
    %59 = vector.extract_strided_slice %37 {offsets = [4, 0], sizes = [1, 64], strides = [1, 1]} : vector<8x64xf32> to vector<1x64xf32>
    %c4_63 = arith.constant 4 : index
    %c0_64 = arith.constant 0 : index
    %c0_65 = arith.constant 0 : index
    %60 = vector.load %arg6[%c4_63, %c0_64, %c0_65] : memref<8x64x8xf32, #tpu.memory_space<vmem>>, vector<1x64x8xf32>
    %61 = vector.shape_cast %60 : vector<1x64x8xf32> to vector<64x8xf32>
    %cst_66 = arith.constant dense<0.000000e+00> : vector<1x8xf32>
    %62 = tpu.matmul %59, %61, %cst_66 {dimension_numbers = #tpu.dot_dimension_numbers<[1], [0], [0], [1], [0, 0, 1, 1], [], []>} : vector<1x64xf32>, vector<64x8xf32>, vector<1x8xf32> -> vector<1x8xf32>
    %63 = arith.addf %58, %62 : vector<1x8xf32>
    %64 = vector.extract_strided_slice %37 {offsets = [5, 0], sizes = [1, 64], strides = [1, 1]} : vector<8x64xf32> to vector<1x64xf32>
    %c5 = arith.constant 5 : index
    %c0_67 = arith.constant 0 : index
    %c0_68 = arith.constant 0 : index
    %65 = vector.load %arg6[%c5, %c0_67, %c0_68] : memref<8x64x8xf32, #tpu.memory_space<vmem>>, vector<1x64x8xf32>
    %66 = vector.shape_cast %65 : vector<1x64x8xf32> to vector<64x8xf32>
    %cst_69 = arith.constant dense<0.000000e+00> : vector<1x8xf32>
    %67 = tpu.matmul %64, %66, %cst_69 {dimension_numbers = #tpu.dot_dimension_numbers<[1], [0], [0], [1], [0, 0, 1, 1], [], []>} : vector<1x64xf32>, vector<64x8xf32>, vector<1x8xf32> -> vector<1x8xf32>
    %68 = arith.addf %63, %67 : vector<1x8xf32>
    %69 = vector.extract_strided_slice %37 {offsets = [6, 0], sizes = [1, 64], strides = [1, 1]} : vector<8x64xf32> to vector<1x64xf32>
    %c6 = arith.constant 6 : index
    %c0_70 = arith.constant 0 : index
    %c0_71 = arith.constant 0 : index
    %70 = vector.load %arg6[%c6, %c0_70, %c0_71] : memref<8x64x8xf32, #tpu.memory_space<vmem>>, vector<1x64x8xf32>
    %71 = vector.shape_cast %70 : vector<1x64x8xf32> to vector<64x8xf32>
    %cst_72 = arith.constant dense<0.000000e+00> : vector<1x8xf32>
    %72 = tpu.matmul %69, %71, %cst_72 {dimension_numbers = #tpu.dot_dimension_numbers<[1], [0], [0], [1], [0, 0, 1, 1], [], []>} : vector<1x64xf32>, vector<64x8xf32>, vector<1x8xf32> -> vector<1x8xf32>
    %73 = arith.addf %68, %72 : vector<1x8xf32>
    %74 = vector.extract_strided_slice %37 {offsets = [7, 0], sizes = [1, 64], strides = [1, 1]} : vector<8x64xf32> to vector<1x64xf32>
    %c7 = arith.constant 7 : index
    %c0_73 = arith.constant 0 : index
    %c0_74 = arith.constant 0 : index
    %75 = vector.load %arg6[%c7, %c0_73, %c0_74] : memref<8x64x8xf32, #tpu.memory_space<vmem>>, vector<1x64x8xf32>
    %76 = vector.shape_cast %75 : vector<1x64x8xf32> to vector<64x8xf32>
    %cst_75 = arith.constant dense<0.000000e+00> : vector<1x8xf32>
    %77 = tpu.matmul %74, %76, %cst_75 {dimension_numbers = #tpu.dot_dimension_numbers<[1], [0], [0], [1], [0, 0, 1, 1], [], []>} : vector<1x64xf32>, vector<64x8xf32>, vector<1x8xf32> -> vector<1x8xf32>
    %78 = arith.addf %73, %77 : vector<1x8xf32>
    %c0_76 = arith.constant 0 : index
    %c0_77 = arith.constant 0 : index
    %c0_78 = arith.constant 0 : index
    %79 = vector.load %arg8[%c0_76, %c0_77, %c0_78] : memref<8x8x64xf32, #tpu.memory_space<vmem>>, vector<1x8x64xf32>
    %80 = vector.shape_cast %79 : vector<1x8x64xf32> to vector<8x64xf32>
    %cst_79 = arith.constant dense<0.000000e+00> : vector<1x64xf32>
    %81 = tpu.matmul %78, %80, %cst_79 {dimension_numbers = #tpu.dot_dimension_numbers<[1], [0], [0], [1], [0, 0, 1, 1], [], []>} : vector<1x8xf32>, vector<8x64xf32>, vector<1x64xf32> -> vector<1x64xf32>
    %c1_80 = arith.constant 1 : index
    %c0_81 = arith.constant 0 : index
    %c0_82 = arith.constant 0 : index
    %82 = vector.load %arg8[%c1_80, %c0_81, %c0_82] : memref<8x8x64xf32, #tpu.memory_space<vmem>>, vector<1x8x64xf32>
    %83 = vector.shape_cast %82 : vector<1x8x64xf32> to vector<8x64xf32>
    %cst_83 = arith.constant dense<0.000000e+00> : vector<1x64xf32>
    %84 = tpu.matmul %78, %83, %cst_83 {dimension_numbers = #tpu.dot_dimension_numbers<[1], [0], [0], [1], [0, 0, 1, 1], [], []>} : vector<1x8xf32>, vector<8x64xf32>, vector<1x64xf32> -> vector<1x64xf32>
    %c2_84 = arith.constant 2 : index
    %c0_85 = arith.constant 0 : index
    %c0_86 = arith.constant 0 : index
    %85 = vector.load %arg8[%c2_84, %c0_85, %c0_86] : memref<8x8x64xf32, #tpu.memory_space<vmem>>, vector<1x8x64xf32>
    %86 = vector.shape_cast %85 : vector<1x8x64xf32> to vector<8x64xf32>
    %cst_87 = arith.constant dense<0.000000e+00> : vector<1x64xf32>
    %87 = tpu.matmul %78, %86, %cst_87 {dimension_numbers = #tpu.dot_dimension_numbers<[1], [0], [0], [1], [0, 0, 1, 1], [], []>} : vector<1x8xf32>, vector<8x64xf32>, vector<1x64xf32> -> vector<1x64xf32>
    %c3_88 = arith.constant 3 : index
    %c0_89 = arith.constant 0 : index
    %c0_90 = arith.constant 0 : index
    %88 = vector.load %arg8[%c3_88, %c0_89, %c0_90] : memref<8x8x64xf32, #tpu.memory_space<vmem>>, vector<1x8x64xf32>
    %89 = vector.shape_cast %88 : vector<1x8x64xf32> to vector<8x64xf32>
    %cst_91 = arith.constant dense<0.000000e+00> : vector<1x64xf32>
    %90 = tpu.matmul %78, %89, %cst_91 {dimension_numbers = #tpu.dot_dimension_numbers<[1], [0], [0], [1], [0, 0, 1, 1], [], []>} : vector<1x8xf32>, vector<8x64xf32>, vector<1x64xf32> -> vector<1x64xf32>
    %c4_92 = arith.constant 4 : index
    %c0_93 = arith.constant 0 : index
    %c0_94 = arith.constant 0 : index
    %91 = vector.load %arg8[%c4_92, %c0_93, %c0_94] : memref<8x8x64xf32, #tpu.memory_space<vmem>>, vector<1x8x64xf32>
    %92 = vector.shape_cast %91 : vector<1x8x64xf32> to vector<8x64xf32>
    %cst_95 = arith.constant dense<0.000000e+00> : vector<1x64xf32>
    %93 = tpu.matmul %78, %92, %cst_95 {dimension_numbers = #tpu.dot_dimension_numbers<[1], [0], [0], [1], [0, 0, 1, 1], [], []>} : vector<1x8xf32>, vector<8x64xf32>, vector<1x64xf32> -> vector<1x64xf32>
    %c5_96 = arith.constant 5 : index
    %c0_97 = arith.constant 0 : index
    %c0_98 = arith.constant 0 : index
    %94 = vector.load %arg8[%c5_96, %c0_97, %c0_98] : memref<8x8x64xf32, #tpu.memory_space<vmem>>, vector<1x8x64xf32>
    %95 = vector.shape_cast %94 : vector<1x8x64xf32> to vector<8x64xf32>
    %cst_99 = arith.constant dense<0.000000e+00> : vector<1x64xf32>
    %96 = tpu.matmul %78, %95, %cst_99 {dimension_numbers = #tpu.dot_dimension_numbers<[1], [0], [0], [1], [0, 0, 1, 1], [], []>} : vector<1x8xf32>, vector<8x64xf32>, vector<1x64xf32> -> vector<1x64xf32>
    %c6_100 = arith.constant 6 : index
    %c0_101 = arith.constant 0 : index
    %c0_102 = arith.constant 0 : index
    %97 = vector.load %arg8[%c6_100, %c0_101, %c0_102] : memref<8x8x64xf32, #tpu.memory_space<vmem>>, vector<1x8x64xf32>
    %98 = vector.shape_cast %97 : vector<1x8x64xf32> to vector<8x64xf32>
    %cst_103 = arith.constant dense<0.000000e+00> : vector<1x64xf32>
    %99 = tpu.matmul %78, %98, %cst_103 {dimension_numbers = #tpu.dot_dimension_numbers<[1], [0], [0], [1], [0, 0, 1, 1], [], []>} : vector<1x8xf32>, vector<8x64xf32>, vector<1x64xf32> -> vector<1x64xf32>
    %c7_104 = arith.constant 7 : index
    %c0_105 = arith.constant 0 : index
    %c0_106 = arith.constant 0 : index
    %100 = vector.load %arg8[%c7_104, %c0_105, %c0_106] : memref<8x8x64xf32, #tpu.memory_space<vmem>>, vector<1x8x64xf32>
    %101 = vector.shape_cast %100 : vector<1x8x64xf32> to vector<8x64xf32>
    %cst_107 = arith.constant dense<0.000000e+00> : vector<1x64xf32>
    %102 = tpu.matmul %78, %101, %cst_107 {dimension_numbers = #tpu.dot_dimension_numbers<[1], [0], [0], [1], [0, 0, 1, 1], [], []>} : vector<1x8xf32>, vector<8x64xf32>, vector<1x64xf32> -> vector<1x64xf32>
    %103 = tpu.concatenate %81, %84, %87, %90, %93, %96, %99, %102 in 0 : vector<1x64xf32>, vector<1x64xf32>, vector<1x64xf32>, vector<1x64xf32>, vector<1x64xf32>, vector<1x64xf32>, vector<1x64xf32>, vector<1x64xf32> -> vector<8x64xf32>
    %c0_108 = arith.constant 0 : index
    %c0_109 = arith.constant 0 : index
    %104 = vector.load %arg9[%c0_108, %c0_109] : memref<8x64xf32, #tpu.memory_space<vmem>>, vector<8x64xf32>
    %105 = arith.addf %103, %104 : vector<8x64xf32>
    %cst_110 = arith.constant 0.000000e+00 : f32
    %106 = vector.broadcast %cst_110 : f32 to vector<12x64xf32>
    %c0_111 = arith.constant 0 : index
    %c0_112 = arith.constant 0 : index
    %107 = vector.load %arg18[%c0_111, %c0_112] : memref<12x64xf32, #tpu.memory_space<vmem>>, vector<12x64xf32>
    tpu.vector_store %arg18[%c0_111, %c0_112], %106 {strides = array<i32>} : memref<12x64xf32, #tpu.memory_space<vmem>>, vector<12x64xf32>,
    %c2_113 = arith.constant 2 : index
    %c0_114 = arith.constant 0 : index
    %108 = vector.load %arg18[%c2_113, %c0_114] : memref<12x64xf32, #tpu.memory_space<vmem>>, vector<8x64xf32>
    tpu.vector_store %arg18[%c2_113, %c0_114], %105 {strides = array<i32>} : memref<12x64xf32, #tpu.memory_space<vmem>>, vector<8x64xf32>,
    %c0_115 = arith.constant 0 : index
    %c0_116 = arith.constant 0 : index
    %109 = vector.load %arg18[%c0_115, %c0_116] : memref<12x64xf32, #tpu.memory_space<vmem>>, vector<8x64xf32>
    %c1_117 = arith.constant 1 : index
    %c0_118 = arith.constant 0 : index
    %110 = vector.load %arg18[%c1_117, %c0_118] : memref<12x64xf32, #tpu.memory_space<vmem>>, vector<8x64xf32>
    %c2_119 = arith.constant 2 : index
    %c0_120 = arith.constant 0 : index
    %111 = vector.load %arg18[%c2_119, %c0_120] : memref<12x64xf32, #tpu.memory_space<vmem>>, vector<8x64xf32>
    %c3_121 = arith.constant 3 : index
    %c0_122 = arith.constant 0 : index
    %112 = vector.load %arg18[%c3_121, %c0_122] : memref<12x64xf32, #tpu.memory_space<vmem>>, vector<8x64xf32>
    %c4_123 = arith.constant 4 : index
    %c0_124 = arith.constant 0 : index
    %113 = vector.load %arg18[%c4_123, %c0_124] : memref<12x64xf32, #tpu.memory_space<vmem>>, vector<8x64xf32>
    %114 = tpu.concatenate %109, %110, %111, %112, %113 in 1 : vector<8x64xf32>, vector<8x64xf32>, vector<8x64xf32>, vector<8x64xf32>, vector<8x64xf32> -> vector<8x320xf32>
    %c0_125 = arith.constant 0 : index
    %c0_126 = arith.constant 0 : index
    %115 = vector.load %arg10[%c0_125, %c0_126] : memref<320x32xf32, #tpu.memory_space<vmem>>, vector<320x32xf32>
    %cst_127 = arith.constant dense<0.000000e+00> : vector<8x32xf32>
    %116 = tpu.matmul %114, %115, %cst_127 {dimension_numbers = #tpu.dot_dimension_numbers<[1], [0], [0], [1], [0, 0, 1, 1], [], []>} : vector<8x320xf32>, vector<320x32xf32>, vector<8x32xf32> -> vector<8x32xf32>
    %c0_128 = arith.constant 0 : index
    %c0_129 = arith.constant 0 : index
    %117 = vector.load %arg11[%c0_128, %c0_129] : memref<1x32xf32, #tpu.memory_space<vmem>>, vector<1x32xf32>
    %118 = vector.broadcast %117 : vector<1x32xf32> to vector<8x32xf32>
    %119 = arith.addf %116, %118 : vector<8x32xf32>
    %cst_130 = arith.constant 0.000000e+00 : f32
    %120 = vector.broadcast %cst_130 : f32 to vector<8x32xf32>
    %121 = arith.maximumf %119, %120 : vector<8x32xf32>
    %cst_131 = arith.constant 0.000000e+00 : f32
    %122 = vector.broadcast %cst_131 : f32 to vector<20x32xf32>
    %c0_132 = arith.constant 0 : index
    %c0_133 = arith.constant 0 : index
    %123 = vector.load %arg19[%c0_132, %c0_133] : memref<20x32xf32, #tpu.memory_space<vmem>>, vector<20x32xf32>
    tpu.vector_store %arg19[%c0_132, %c0_133], %122 {strides = array<i32>} : memref<20x32xf32, #tpu.memory_space<vmem>>, vector<20x32xf32>,
    %c2_134 = arith.constant 2 : index
    %c0_135 = arith.constant 0 : index
    %124 = tpu.strided_load %arg19[%c2_134, %c0_135] {strides = array<i32: 2, 1>} : memref<20x32xf32, #tpu.memory_space<vmem>>, vector<8x32xf32>
    tpu.strided_store %arg19[%c2_134, %c0_135], %121 {strides = array<i32: 2, 1>} : memref<20x32xf32, #tpu.memory_space<vmem>>, vector<8x32xf32>
    %c3_136 = arith.constant 3 : index
    %c0_137 = arith.constant 0 : index
    %125 = tpu.strided_load %arg19[%c3_136, %c0_137] {strides = array<i32: 2, 1>} : memref<20x32xf32, #tpu.memory_space<vmem>>, vector<8x32xf32>
    tpu.strided_store %arg19[%c3_136, %c0_137], %121 {strides = array<i32: 2, 1>} : memref<20x32xf32, #tpu.memory_space<vmem>>, vector<8x32xf32>
    %c0_138 = arith.constant 0 : index
    %c0_139 = arith.constant 0 : index
    %126 = vector.load %arg19[%c0_138, %c0_139] : memref<20x32xf32, #tpu.memory_space<vmem>>, vector<16x32xf32>
    %c1_140 = arith.constant 1 : index
    %c0_141 = arith.constant 0 : index
    %127 = vector.load %arg19[%c1_140, %c0_141] : memref<20x32xf32, #tpu.memory_space<vmem>>, vector<16x32xf32>
    %c2_142 = arith.constant 2 : index
    %c0_143 = arith.constant 0 : index
    %128 = vector.load %arg19[%c2_142, %c0_143] : memref<20x32xf32, #tpu.memory_space<vmem>>, vector<16x32xf32>
    %c3_144 = arith.constant 3 : index
    %c0_145 = arith.constant 0 : index
    %129 = vector.load %arg19[%c3_144, %c0_145] : memref<20x32xf32, #tpu.memory_space<vmem>>, vector<16x32xf32>
    %c4_146 = arith.constant 4 : index
    %c0_147 = arith.constant 0 : index
    %130 = vector.load %arg19[%c4_146, %c0_147] : memref<20x32xf32, #tpu.memory_space<vmem>>, vector<16x32xf32>
    %131 = tpu.concatenate %126, %127, %128, %129, %130 in 1 : vector<16x32xf32>, vector<16x32xf32>, vector<16x32xf32>, vector<16x32xf32>, vector<16x32xf32> -> vector<16x160xf32>
    %c0_148 = arith.constant 0 : index
    %c0_149 = arith.constant 0 : index
    %132 = vector.load %arg12[%c0_148, %c0_149] : memref<160x1xf32, #tpu.memory_space<vmem>>, vector<160x1xf32>
    %cst_150 = arith.constant dense<0.000000e+00> : vector<16x1xf32>
    %133 = tpu.matmul %131, %132, %cst_150 {dimension_numbers = #tpu.dot_dimension_numbers<[1], [0], [0], [1], [0, 0, 1, 1], [], []>} : vector<16x160xf32>, vector<160x1xf32>, vector<16x1xf32> -> vector<16x1xf32>
    %c0_151 = arith.constant 0 : index
    %c0_152 = arith.constant 0 : index
    %134 = vector.load %arg13[%c0_151, %c0_152] : memref<1x1xf32, #tpu.memory_space<vmem>>, vector<1x1xf32>
    %135 = vector.broadcast %134 : vector<1x1xf32> to vector<16x1xf32>
    %136 = arith.addf %133, %135 : vector<16x1xf32>
    %137 = arith.negf %136 : vector<16x1xf32>
    %138 = math.exp %137 : vector<16x1xf32>
    %cst_153 = arith.constant 1.000000e+00 : f32
    %139 = vector.broadcast %cst_153 : f32 to vector<16x1xf32>
    %140 = arith.addf %139, %138 : vector<16x1xf32>
    %141 = arith.divf %139, %140 : vector<16x1xf32>
    %c0_154 = arith.constant 0 : index
    %c0_155 = arith.constant 0 : index
    %c0_156 = arith.constant 0 : index
    %142 = vector.load %arg14[%c0_154, %c0_155, %c0_156] : memref<1x16x1xf32, #tpu.memory_space<vmem>>, vector<1x16x1xf32>
    %143 = vector.shape_cast %142 : vector<1x16x1xf32> to vector<16x1xf32>
    %144 = vector.shape_cast %141 : vector<16x1xf32> to vector<1x16x1xf32>
    tpu.vector_store %arg14[%c0_154, %c0_155, %c0_156], %144 {strides = array<i32>} : memref<1x16x1xf32, #tpu.memory_space<vmem>>, vector<1x16x1xf32>,
    return
  }
  func.func @transform_0(%arg0: i32) -> (i32, i32, i32) {
    %c0_i32 = arith.constant 0 : i32
    %c0_i32_0 = arith.constant 0 : i32
    %c0_i32_1 = arith.constant 0 : i32
    return %arg0, %c0_i32, %c0_i32_0 : i32, i32, i32
  }
  func.func @transform_1(%arg0: i32) -> (i32, i32) {
    %c0_i32 = arith.constant 0 : i32
    %c0_i32_0 = arith.constant 0 : i32
    %c0_i32_1 = arith.constant 0 : i32
    return %c0_i32, %c0_i32_0 : i32, i32
  }
  func.func @transform_2(%arg0: i32) -> (i32, i32) {
    %c0_i32 = arith.constant 0 : i32
    %c0_i32_0 = arith.constant 0 : i32
    %c0_i32_1 = arith.constant 0 : i32
    return %c0_i32, %c0_i32_0 : i32, i32
  }
  func.func @transform_3(%arg0: i32) -> (i32, i32) {
    %c0_i32 = arith.constant 0 : i32
    %c0_i32_0 = arith.constant 0 : i32
    %c0_i32_1 = arith.constant 0 : i32
    return %c0_i32, %c0_i32_0 : i32, i32
  }
  func.func @transform_4(%arg0: i32) -> (i32, i32) {
    %c0_i32 = arith.constant 0 : i32
    %c0_i32_0 = arith.constant 0 : i32
    %c0_i32_1 = arith.constant 0 : i32
    return %c0_i32, %c0_i32_0 : i32, i32
  }
  func.func @transform_5(%arg0: i32) -> (i32, i32, i32) {
    %c0_i32 = arith.constant 0 : i32
    %c0_i32_0 = arith.constant 0 : i32
    %c0_i32_1 = arith.constant 0 : i32
    %c0_i32_2 = arith.constant 0 : i32
    return %c0_i32, %c0_i32_0, %c0_i32_1 : i32, i32, i32
  }
  func.func @transform_6(%arg0: i32) -> (i32, i32) {
    %c0_i32 = arith.constant 0 : i32
    %c0_i32_0 = arith.constant 0 : i32
    %c0_i32_1 = arith.constant 0 : i32
    return %c0_i32, %c0_i32_0 : i32, i32
  }
  func.func @transform_7(%arg0: i32) -> (i32, i32, i32) {
    %c0_i32 = arith.constant 0 : i32
    %c0_i32_0 = arith.constant 0 : i32
    %c0_i32_1 = arith.constant 0 : i32
    %c0_i32_2 = arith.constant 0 : i32
    return %c0_i32, %c0_i32_0, %c0_i32_1 : i32, i32, i32
  }
  func.func @transform_8(%arg0: i32) -> (i32, i32) {
    %c0_i32 = arith.constant 0 : i32
    %c0_i32_0 = arith.constant 0 : i32
    %c0_i32_1 = arith.constant 0 : i32
    return %c0_i32, %c0_i32_0 : i32, i32
  }
  func.func @transform_9(%arg0: i32) -> (i32, i32) {
    %c0_i32 = arith.constant 0 : i32
    %c0_i32_0 = arith.constant 0 : i32
    %c0_i32_1 = arith.constant 0 : i32
    return %c0_i32, %c0_i32_0 : i32, i32
  }
  func.func @transform_10(%arg0: i32) -> (i32, i32) {
    %c0_i32 = arith.constant 0 : i32
    %c0_i32_0 = arith.constant 0 : i32
    %c0_i32_1 = arith.constant 0 : i32
    return %c0_i32, %c0_i32_0 : i32, i32
  }
  func.func @transform_11(%arg0: i32) -> (i32, i32) {
    %c0_i32 = arith.constant 0 : i32
    %c0_i32_0 = arith.constant 0 : i32
    %c0_i32_1 = arith.constant 0 : i32
    return %c0_i32, %c0_i32_0 : i32, i32
  }
  func.func @transform_12(%arg0: i32) -> (i32, i32) {
    %c0_i32 = arith.constant 0 : i32
    %c0_i32_0 = arith.constant 0 : i32
    %c0_i32_1 = arith.constant 0 : i32
    return %c0_i32, %c0_i32_0 : i32, i32
  }
  func.func @transform_13(%arg0: i32) -> (i32, i32, i32) {
    %c0_i32 = arith.constant 0 : i32
    %c0_i32_0 = arith.constant 0 : i32
    %c0_i32_1 = arith.constant 0 : i32
    return %arg0, %c0_i32, %c0_i32_0 : i32, i32, i32
  }
}

</mosaic_0001>

<llo_original>
// kernel: gencoder_autoencoder_forward.1
$region0: #{gencoder_autoencoder_forward.1}
  #allocation0 [shape = 'u32[]', space=smem, size = 0x4, offset = 0x4, fixed_abs, tag = 'smem constant byte address 0x4 - core index']
  #allocation1 [shape = 'u32[144,128]{1,0:T(1,128)}', space=vmem, size = 0x12000, scoped, tag = 'internal scratch']
  #allocation2 [shape = 'f32[20,1]{1,0:T(8,128)}', space=vmem, size = 0x3000, scoped, tag = 'scratch operand']
  #allocation3 [shape = 'f32[20,32]{1,0:T(8,128)}', space=vmem, size = 0x3000, scoped, tag = 'scratch operand']
  #allocation4 [shape = 'f32[16,64]{1,0:T(8,128)}', space=vmem, size = 0x2000, scoped, tag = 'scratch operand']
  #allocation5 [shape = 'f32[12,64]{1,0:T(8,128)}', space=vmem, size = 0x2000, scoped, tag = 'scratch operand']
  #allocation6 [shape = 'f32[20,32]{1,0:T(8,128)}', space=vmem, size = 0x3000, scoped, tag = 'scratch operand']
  #allocation7 [shape = 'f32[1,1]{1,0:T(1,128)S(1)}', space=vmem, size = 0x200, scoped, tag = 'scoped memory for gencoder_autoencoder_forward.1']
  %s0 = inlined_call_operand.vmem [shape: f32[2,16,1], index: 0, kind: input, shape index: {}]
  %s1 = inlined_call_operand.vmem [shape: f32[5,32], index: 1, kind: input, shape index: {}]
  %s2 = inlined_call_operand.vmem [shape: f32[1,32], index: 2, kind: input, shape index: {}]
  %s3 = inlined_call_operand.vmem [shape: f32[160,64], index: 3, kind: input, shape index: {}]
  %s4 = inlined_call_operand.vmem [shape: f32[1,64], index: 4, kind: input, shape index: {}]
  %s5 = inlined_call_operand.vmem [shape: f32[8,64,8], index: 5, kind: input, shape index: {}]
  %s6 = inlined_call_operand.vmem [shape: f32[1,8], index: 6, kind: input, shape index: {}]
  %s7 = inlined_call_operand.vmem [shape: f32[8,8,64], index: 7, kind: input, shape index: {}]
  %s8 = inlined_call_operand.vmem [shape: f32[8,64], index: 8, kind: input, shape index: {}]
  %s9 = inlined_call_operand.vmem [shape: f32[320,32], index: 9, kind: input, shape index: {}]
  %s10 = inlined_call_operand.vmem [shape: f32[1,32], index: 10, kind: input, shape index: {}]
  %s11 = inlined_call_operand.vmem [shape: f32[160,1], index: 11, kind: input, shape index: {}]
  %s12 = inlined_call_operand.<no memory space> [shape: f32[1,1], index: 12, kind: input, shape index: {}]
  %s13 = inlined_call_operand.vmem [shape: f32[2,16,1], index: 13, kind: output, shape index: {}]
  %s14 = sld [smem:[#allocation0]]
  $region85: #{gencoder_autoencoder_forward.1} parent=0
    _
  %s16 = ssub.s32 1, %s14
  %s17 = scalar_select 0, %s16, %s14
  %v18 = vstv %s12
  %19 = vst [vmem:[#allocation7] sm:$0x1] %v18
  loop: start=0, step=1, limit=4
  $region2: #{gencoder_autoencoder_forward.1} parent=0 // loop_pre_header
    _
  $region3: #{gencoder_autoencoder_forward.1} parent=0 // loop_header
    %s21 = sphi 0, %s25
    %p22 = scmp.ge.s32.totalorder %s21, 4
    %s31 = sphi 0, %s33
    %s34 = sphi 0, %s31
    %s35 = sphi 0, %s34
    %s51 = sphi 0, %s35
    %s55 = sphi 0, %s55
    %s57 = sphi 0, %s55
    %s58 = sphi 0, %s57
    %s72 = sphi 0, %s58
    %s76 = sphi 0, %s76
    %s78 = sphi 0, %s76
    %s79 = sphi 0, %s78
    %s93 = sphi 0, %s79
    %s97 = sphi 0, %s97
    %s99 = sphi 0, %s97
    %s100 = sphi 0, %s99
    %s114 = sphi 0, %s100
    %s118 = sphi 0, %s118
    %s120 = sphi 0, %s118
    %s121 = sphi 0, %s120
    %s135 = sphi 0, %s121
    %s139 = sphi 0, %s139
    %s141 = sphi 0, %s139
    %s142 = sphi 0, %s141
    %s156 = sphi 0, %s142
    %s160 = sphi 0, %s160
    %s162 = sphi 0, %s160
    %s163 = sphi 0, %s162
    %s177 = sphi 0, %s163
    %s181 = sphi 0, %s181
    %s183 = sphi 0, %s181
    %s184 = sphi 0, %s183
    %s198 = sphi 0, %s184
    %s202 = sphi 0, %s202
    %s204 = sphi 0, %s202
    %s205 = sphi 0, %s204
    %s219 = sphi 0, %s205
    %s223 = sphi 0, %s223
    %s225 = sphi 0, %s223
    %s226 = sphi 0, %s225
    %s240 = sphi 0, %s226
    %s244 = sphi 0, %s244
    %s246 = sphi 0, %s244
    %s247 = sphi 0, %s246
    %s261 = sphi 0, %s247
    %s265 = sphi 0, %s265
    %s267 = sphi 0, %s265
    %s268 = sphi 0, %s267
    %s282 = sphi 0, %s268
    %s286 = sphi 0, %s286
    %s288 = sphi 0, %s286
    %s289 = sphi 0, %s288
    %s303 = sphi 0, %s289
    %s309 = sphi 0, %s311
    %s312 = sphi 0, %s309
    %s313 = sphi 0, %s312
    %s329 = sphi 0, %s313
  $region4: #{gencoder_autoencoder_forward.1} parent=0 // loop_header_branch
    %24 = sbr.rel (%p22) target = $region8
  $region5: #{gencoder_autoencoder_forward.1} parent=0 // loop_body
    %s26 = ssub.s32 %s21, 1
    %s27 = ssub.s32 %s21, 2
    %s28 = sadd.s32 %s21, 1
    %s29 = ssub.s32 %s21, %s28
    %p30 = scmp.eq.s32.totalorder %s29, 0
    %s32 = sadd.s32 %s31, 1
    %s33 = scalar_select %p30, %s31, %s32
    %p36 = pneg %p30
    %p37 = scmp.eq.s32.totalorder %s21, 1
    %p38 = por %p36, %p37
    %p39 = scmp.ne.s32.totalorder %s31, %s34
    %p40 = scmp.eq.s32.totalorder %s21, 0
    %p41 = por %p39, %p40
    %p42 = scmp.ne.s32.totalorder %s31, %s34
    %p43 = scmp.eq.s32.totalorder %s26, 1
    %p44 = por %p42, %p43
    %p45 = scmp.ne.s32.totalorder %s34, %s35
    %p46 = scmp.eq.s32.totalorder %s26, 0
    %p47 = por %p45, %p46
    %p48 = scmp.ne.s32.totalorder %s34, %s35
    %p49 = scmp.eq.s32.totalorder %s27, 1
    %p50 = por %p48, %p49
    %p52 = scmp.ne.s32.totalorder %s35, %s51
    %p53 = scmp.eq.s32.totalorder %s27, 0
    %p54 = por %p52, %p53
    %s56 = sadd.s32 %s55, 1
    %p59 = scmp.eq.s32.totalorder %s21, 1
    %p60 = scmp.ne.s32.totalorder %s55, %s57
    %p61 = scmp.eq.s32.totalorder %s21, 0
    %p62 = por %p60, %p61
    %p63 = scmp.ne.s32.totalorder %s55, %s57
    %p64 = scmp.eq.s32.totalorder %s26, 1
    %p65 = por %p63, %p64
    %p66 = scmp.ne.s32.totalorder %s57, %s58
    %p67 = scmp.eq.s32.totalorder %s26, 0
    %p68 = por %p66, %p67
    %p69 = scmp.ne.s32.totalorder %s57, %s58
    %p70 = scmp.eq.s32.totalorder %s27, 1
    %p71 = por %p69, %p70
    %p73 = scmp.ne.s32.totalorder %s58, %s72
    %p74 = scmp.eq.s32.totalorder %s27, 0
    %p75 = por %p73, %p74
    %s77 = sadd.s32 %s76, 1
    %p80 = scmp.eq.s32.totalorder %s21, 1
    %p81 = scmp.ne.s32.totalorder %s76, %s78
    %p82 = scmp.eq.s32.totalorder %s21, 0
    %p83 = por %p81, %p82
    %p84 = scmp.ne.s32.totalorder %s76, %s78
    %p85 = scmp.eq.s32.totalorder %s26, 1
    %p86 = por %p84, %p85
    %p87 = scmp.ne.s32.totalorder %s78, %s79
    %p88 = scmp.eq.s32.totalorder %s26, 0
    %p89 = por %p87, %p88
    %p90 = scmp.ne.s32.totalorder %s78, %s79
    %p91 = scmp.eq.s32.totalorder %s27, 1
    %p92 = por %p90, %p91
    %p94 = scmp.ne.s32.totalorder %s79, %s93
    %p95 = scmp.eq.s32.totalorder %s27, 0
    %p96 = por %p94, %p95
    %s98 = sadd.s32 %s97, 1
    %p101 = scmp.eq.s32.totalorder %s21, 1
    %p102 = scmp.ne.s32.totalorder %s97, %s99
    %p103 = scmp.eq.s32.totalorder %s21, 0
    %p104 = por %p102, %p103
    %p105 = scmp.ne.s32.totalorder %s97, %s99
    %p106 = scmp.eq.s32.totalorder %s26, 1
    %p107 = por %p105, %p106
    %p108 = scmp.ne.s32.totalorder %s99, %s100
    %p109 = scmp.eq.s32.totalorder %s26, 0
    %p110 = por %p108, %p109
    %p111 = scmp.ne.s32.totalorder %s99, %s100
    %p112 = scmp.eq.s32.totalorder %s27, 1
    %p113 = por %p111, %p112
    %p115 = scmp.ne.s32.totalorder %s100, %s114
    %p116 = scmp.eq.s32.totalorder %s27, 0
    %p117 = por %p115, %p116
    %s119 = sadd.s32 %s118, 1
    %p122 = scmp.eq.s32.totalorder %s21, 1
    %p123 = scmp.ne.s32.totalorder %s118, %s120
    %p124 = scmp.eq.s32.totalorder %s21, 0
    %p125 = por %p123, %p124
    %p126 = scmp.ne.s32.totalorder %s118, %s120
    %p127 = scmp.eq.s32.totalorder %s26, 1
    %p128 = por %p126, %p127
    %p129 = scmp.ne.s32.totalorder %s120, %s121
    %p130 = scmp.eq.s32.totalorder %s26, 0
    %p131 = por %p129, %p130
    %p132 = scmp.ne.s32.totalorder %s120, %s121
    %p133 = scmp.eq.s32.totalorder %s27, 1
    %p134 = por %p132, %p133
    %p136 = scmp.ne.s32.totalorder %s121, %s135
    %p137 = scmp.eq.s32.totalorder %s27, 0
    %p138 = por %p136, %p137
    %s140 = sadd.s32 %s139, 1
    %p143 = scmp.eq.s32.totalorder %s21, 1
    %p144 = scmp.ne.s32.totalorder %s139, %s141
    %p145 = scmp.eq.s32.totalorder %s21, 0
    %p146 = por %p144, %p145
    %p147 = scmp.ne.s32.totalorder %s139, %s141
    %p148 = scmp.eq.s32.totalorder %s26, 1
    %p149 = por %p147, %p148
    %p150 = scmp.ne.s32.totalorder %s141, %s142
    %p151 = scmp.eq.s32.totalorder %s26, 0
    %p152 = por %p150, %p151
    %p153 = scmp.ne.s32.totalorder %s141, %s142
    %p154 = scmp.eq.s32.totalorder %s27, 1
    %p155 = por %p153, %p154
    %p157 = scmp.ne.s32.totalorder %s142, %s156
    %p158 = scmp.eq.s32.totalorder %s27, 0
    %p159 = por %p157, %p158
    %s161 = sadd.s32 %s160, 1
    %p164 = scmp.eq.s32.totalorder %s21, 1
    %p165 = scmp.ne.s32.totalorder %s160, %s162
    %p166 = scmp.eq.s32.totalorder %s21, 0
    %p167 = por %p165, %p166
    %p168 = scmp.ne.s32.totalorder %s160, %s162
    %p169 = scmp.eq.s32.totalorder %s26, 1
    %p170 = por %p168, %p169
    %p171 = scmp.ne.s32.totalorder %s162, %s163
    %p172 = scmp.eq.s32.totalorder %s26, 0
    %p173 = por %p171, %p172
    %p174 = scmp.ne.s32.totalorder %s162, %s163
    %p175 = scmp.eq.s32.totalorder %s27, 1
    %p176 = por %p174, %p175
    %p178 = scmp.ne.s32.totalorder %s163, %s177
    %p179 = scmp.eq.s32.totalorder %s27, 0
    %p180 = por %p178, %p179
    %s182 = sadd.s32 %s181, 1
    %p185 = scmp.eq.s32.totalorder %s21, 1
    %p186 = scmp.ne.s32.totalorder %s181, %s183
    %p187 = scmp.eq.s32.totalorder %s21, 0
    %p188 = por %p186, %p187
    %p189 = scmp.ne.s32.totalorder %s181, %s183
    %p190 = scmp.eq.s32.totalorder %s26, 1
    %p191 = por %p189, %p190
    %p192 = scmp.ne.s32.totalorder %s183, %s184
    %p193 = scmp.eq.s32.totalorder %s26, 0
    %p194 = por %p192, %p193
    %p195 = scmp.ne.s32.totalorder %s183, %s184
    %p196 = scmp.eq.s32.totalorder %s27, 1
    %p197 = por %p195, %p196
    %p199 = scmp.ne.s32.totalorder %s184, %s198
    %p200 = scmp.eq.s32.totalorder %s27, 0
    %p201 = por %p199, %p200
    %s203 = sadd.s32 %s202, 1
    %p206 = scmp.eq.s32.totalorder %s21, 1
    %p207 = scmp.ne.s32.totalorder %s202, %s204
    %p208 = scmp.eq.s32.totalorder %s21, 0
    %p209 = por %p207, %p208
    %p210 = scmp.ne.s32.totalorder %s202, %s204
    %p211 = scmp.eq.s32.totalorder %s26, 1
    %p212 = por %p210, %p211
    %p213 = scmp.ne.s32.totalorder %s204, %s205
    %p214 = scmp.eq.s32.totalorder %s26, 0
    %p215 = por %p213, %p214
    %p216 = scmp.ne.s32.totalorder %s204, %s205
    %p217 = scmp.eq.s32.totalorder %s27, 1
    %p218 = por %p216, %p217
    %p220 = scmp.ne.s32.totalorder %s205, %s219
    %p221 = scmp.eq.s32.totalorder %s27, 0
    %p222 = por %p220, %p221
    %s224 = sadd.s32 %s223, 1
    %p227 = scmp.eq.s32.totalorder %s21, 1
    %p228 = scmp.ne.s32.totalorder %s223, %s225
    %p229 = scmp.eq.s32.totalorder %s21, 0
    %p230 = por %p228, %p229
    %p231 = scmp.ne.s32.totalorder %s223, %s225
    %p232 = scmp.eq.s32.totalorder %s26, 1
    %p233 = por %p231, %p232
    %p234 = scmp.ne.s32.totalorder %s225, %s226
    %p235 = scmp.eq.s32.totalorder %s26, 0
    %p236 = por %p234, %p235
    %p237 = scmp.ne.s32.totalorder %s225, %s226
    %p238 = scmp.eq.s32.totalorder %s27, 1
    %p239 = por %p237, %p238
    %p241 = scmp.ne.s32.totalorder %s226, %s240
    %p242 = scmp.eq.s32.totalorder %s27, 0
    %p243 = por %p241, %p242
    %s245 = sadd.s32 %s244, 1
    %p248 = scmp.eq.s32.totalorder %s21, 1
    %p249 = scmp.ne.s32.totalorder %s244, %s246
    %p250 = scmp.eq.s32.totalorder %s21, 0
    %p251 = por %p249, %p250
    %p252 = scmp.ne.s32.totalorder %s244, %s246
    %p253 = scmp.eq.s32.totalorder %s26, 1
    %p254 = por %p252, %p253
    %p255 = scmp.ne.s32.totalorder %s246, %s247
    %p256 = scmp.eq.s32.totalorder %s26, 0
    %p257 = por %p255, %p256
    %p258 = scmp.ne.s32.totalorder %s246, %s247
    %p259 = scmp.eq.s32.totalorder %s27, 1
    %p260 = por %p258, %p259
    %p262 = scmp.ne.s32.totalorder %s247, %s261
    %p263 = scmp.eq.s32.totalorder %s27, 0
    %p264 = por %p262, %p263
    %s266 = sadd.s32 %s265, 1
    %p269 = scmp.eq.s32.totalorder %s21, 1
    %p270 = scmp.ne.s32.totalorder %s265, %s267
    %p271 = scmp.eq.s32.totalorder %s21, 0
    %p272 = por %p270, %p271
    %p273 = scmp.ne.s32.totalorder %s265, %s267
    %p274 = scmp.eq.s32.totalorder %s26, 1
    %p275 = por %p273, %p274
    %p276 = scmp.ne.s32.totalorder %s267, %s268
    %p277 = scmp.eq.s32.totalorder %s26, 0
    %p278 = por %p276, %p277
    %p279 = scmp.ne.s32.totalorder %s267, %s268
    %p280 = scmp.eq.s32.totalorder %s27, 1
    %p281 = por %p279, %p280
    %p283 = scmp.ne.s32.totalorder %s268, %s282
    %p284 = scmp.eq.s32.totalorder %s27, 0
    %p285 = por %p283, %p284
    %s287 = sadd.s32 %s286, 1
    %p290 = scmp.eq.s32.totalorder %s21, 1
    %p291 = scmp.ne.s32.totalorder %s286, %s288
    %p292 = scmp.eq.s32.totalorder %s21, 0
    %p293 = por %p291, %p292
    %p294 = scmp.ne.s32.totalorder %s286, %s288
    %p295 = scmp.eq.s32.totalorder %s26, 1
    %p296 = por %p294, %p295
    %p297 = scmp.ne.s32.totalorder %s288, %s289
    %p298 = scmp.eq.s32.totalorder %s26, 0
    %p299 = por %p297, %p298
    %p300 = scmp.ne.s32.totalorder %s288, %s289
    %p301 = scmp.eq.s32.totalorder %s27, 1
    %p302 = por %p300, %p301
    %p304 = scmp.ne.s32.totalorder %s289, %s303
    %p305 = scmp.eq.s32.totalorder %s27, 0
    %p306 = por %p304, %p305
    %s307 = ssub.s32 %s21, %s28
    %p308 = scmp.eq.s32.totalorder %s307, 0
    %s310 = sadd.s32 %s309, 1
    %s311 = scalar_select %p308, %s309, %s310
    %p314 = pneg %p308
    %p315 = scmp.eq.s32.totalorder %s21, 1
    %p316 = por %p314, %p315
    %p317 = scmp.ne.s32.totalorder %s309, %s312
    %p318 = scmp.eq.s32.totalorder %s21, 0
    %p319 = por %p317, %p318
    %p320 = scmp.ne.s32.totalorder %s309, %s312
    %p321 = scmp.eq.s32.totalorder %s26, 1
    %p322 = por %p320, %p321
    %p323 = scmp.ne.s32.totalorder %s312, %s313
    %p324 = scmp.eq.s32.totalorder %s26, 0
    %p325 = por %p323, %p324
    %p326 = scmp.ne.s32.totalorder %s312, %s313
    %p327 = scmp.eq.s32.totalorder %s27, 1
    %p328 = por %p326, %p327
    %p330 = scmp.ne.s32.totalorder %s313, %s329
    %p331 = scmp.eq.s32.totalorder %s27, 0
    %p332 = por %p330, %p331
    %p333 = scmp.le.s32.totalorder 1, %s21
    %p334 = scmp.lt.s32.totalorder %s21, 3
    %p335 = pnand %p333, %p334
    %p336 = pneg %p335
    // Predicated region
    $region9: #{gencoder_autoencoder_forward.1} parent=5 // pred_check
      _
    $region10: #{gencoder_autoencoder_forward.1} parent=5 // pred_check_branch
      %338 = sbr.rel (%p335) target = $region12
    $region11: #{gencoder_autoencoder_forward.1} parent=5 // pred_region
      %s339 = ssub.s32 %s21, 1
      // Predicated region
      $region13: #{gencoder_autoencoder_forward.1} parent=11 // pred_check
        %p340 = pneg %p68
      $region14: #{gencoder_autoencoder_forward.1} parent=11 // pred_check_branch
        %342 = sbr.rel (%p340) target = $region16
      $region15: #{gencoder_autoencoder_forward.1} parent=11 // pred_region
        _
      $region16: #{gencoder_autoencoder_forward.1} parent=11 // pred_fallthru
        _
      // Predicated region
      $region17: #{gencoder_autoencoder_forward.1} parent=11 // pred_check
        %p343 = pneg %p89
      $region18: #{gencoder_autoencoder_forward.1} parent=11 // pred_check_branch
        %345 = sbr.rel (%p343) target = $region20
      $region19: #{gencoder_autoencoder_forward.1} parent=11 // pred_region
        _
      $region20: #{gencoder_autoencoder_forward.1} parent=11 // pred_fallthru
        _
      // Predicated region
      $region21: #{gencoder_autoencoder_forward.1} parent=11 // pred_check
        %p346 = pneg %p110
      $region22: #{gencoder_autoencoder_forward.1} parent=11 // pred_check_branch
        %348 = sbr.rel (%p346) target = $region24
      $region23: #{gencoder_autoencoder_forward.1} parent=11 // pred_region
        _
      $region24: #{gencoder_autoencoder_forward.1} parent=11 // pred_fallthru
        _
      // Predicated region
      $region25: #{gencoder_autoencoder_forward.1} parent=11 // pred_check
        %p349 = pneg %p131
      $region26: #{gencoder_autoencoder_forward.1} parent=11 // pred_check_branch
        %351 = sbr.rel (%p349) target = $region28
      $region27: #{gencoder_autoencoder_forward.1} parent=11 // pred_region
        _
      $region28: #{gencoder_autoencoder_forward.1} parent=11 // pred_fallthru
        _
      // Predicated region
      $region29: #{gencoder_autoencoder_forward.1} parent=11 // pred_check
        %p352 = pneg %p152
      $region30: #{gencoder_autoencoder_forward.1} parent=11 // pred_check_branch
        %354 = sbr.rel (%p352) target = $region32
      $region31: #{gencoder_autoencoder_forward.1} parent=11 // pred_region
        _
      $region32: #{gencoder_autoencoder_forward.1} parent=11 // pred_fallthru
        _
      // Predicated region
      $region33: #{gencoder_autoencoder_forward.1} parent=11 // pred_check
        %p355 = pneg %p173
      $region34: #{gencoder_autoencoder_forward.1} parent=11 // pred_check_branch
        %357 = sbr.rel (%p355) target = $region36
      $region35: #{gencoder_autoencoder_forward.1} parent=11 // pred_region
        _
      $region36: #{gencoder_autoencoder_forward.1} parent=11 // pred_fallthru
        _
      // Predicated region
      $region37: #{gencoder_autoencoder_forward.1} parent=11 // pred_check
        %p358 = pneg %p194
      $region38: #{gencoder_autoencoder_forward.1} parent=11 // pred_check_branch
        %360 = sbr.rel (%p358) target = $region40
      $region39: #{gencoder_autoencoder_forward.1} parent=11 // pred_region
        _
      $region40: #{gencoder_autoencoder_forward.1} parent=11 // pred_fallthru
        _
      // Predicated region
      $region41: #{gencoder_autoencoder_forward.1} parent=11 // pred_check
        %p361 = pneg %p215
      $region42: #{gencoder_autoencoder_forward.1} parent=11 // pred_check_branch
        %363 = sbr.rel (%p361) target = $region44
      $region43: #{gencoder_autoencoder_forward.1} parent=11 // pred_region
        _
      $region44: #{gencoder_autoencoder_forward.1} parent=11 // pred_fallthru
        _
      // Predicated region
      $region45: #{gencoder_autoencoder_forward.1} parent=11 // pred_check
        %p364 = pneg %p236
      $region46: #{gencoder_autoencoder_forward.1} parent=11 // pred_check_branch
        %366 = sbr.rel (%p364) target = $region48
      $region47: #{gencoder_autoencoder_forward.1} parent=11 // pred_region
        _
      $region48: #{gencoder_autoencoder_forward.1} parent=11 // pred_fallthru
        _
      // Predicated region
      $region49: #{gencoder_autoencoder_forward.1} parent=11 // pred_check
        %p367 = pneg %p257
      $region50: #{gencoder_autoencoder_forward.1} parent=11 // pred_check_branch
        %369 = sbr.rel (%p367) target = $region52
      $region51: #{gencoder_autoencoder_forward.1} parent=11 // pred_region
        _
      $region52: #{gencoder_autoencoder_forward.1} parent=11 // pred_fallthru
        _
      // Predicated region
      $region53: #{gencoder_autoencoder_forward.1} parent=11 // pred_check
        %p370 = pneg %p278
      $region54: #{gencoder_autoencoder_forward.1} parent=11 // pred_check_branch
        %372 = sbr.rel (%p370) target = $region56
      $region55: #{gencoder_autoencoder_forward.1} parent=11 // pred_region
        _
      $region56: #{gencoder_autoencoder_forward.1} parent=11 // pred_fallthru
        _
      // Predicated region
      $region57: #{gencoder_autoencoder_forward.1} parent=11 // pred_check
        %p373 = pneg %p299
      $region58: #{gencoder_autoencoder_forward.1} parent=11 // pred_check_branch
        %375 = sbr.rel (%p373) target = $region60
      $region59: #{gencoder_autoencoder_forward.1} parent=11 // pred_region
        _
      $region60: #{gencoder_autoencoder_forward.1} parent=11 // pred_fallthru
        _
    $region12: #{gencoder_autoencoder_forward.1} parent=5 // pred_fallthru
      _
    %p376 = scmp.lt.s32.totalorder %s21, 2
    // Predicated region
    $region61: #{gencoder_autoencoder_forward.1} parent=5 // pred_check
      %p377 = pneg %p376
    $region62: #{gencoder_autoencoder_forward.1} parent=5 // pred_check_branch
      %379 = sbr.rel (%p377) target = $region64
    $region63: #{gencoder_autoencoder_forward.1} parent=5 // pred_region
      // Predicated region
      $region65: #{gencoder_autoencoder_forward.1} parent=63 // pred_check
        %p380 = pneg %p41
      $region66: #{gencoder_autoencoder_forward.1} parent=63 // pred_check_branch
        %382 = sbr.rel (%p380) target = $region68
      $region67: #{gencoder_autoencoder_forward.1} parent=63 // pred_region
        %p383 = scmp.lt.s32.totalorder %s21, 1
        %s384 = scalar_select %p383, %s21, 1
        %s385 = smul.addr %s384, 2
        %s386 = smul.addr %s385, 8
        %s387 = scalar_lea.vmem %s0, %s386
      $region68: #{gencoder_autoencoder_forward.1} parent=63 // pred_fallthru
        _
    $region64: #{gencoder_autoencoder_forward.1} parent=5 // pred_fallthru
      _
    %p388 = scmp.le.s32.totalorder 1, %s21
    %p389 = scmp.lt.s32.totalorder %s21, 3
    %p390 = pnand %p388, %p389
    %p391 = pneg %p390
    // Predicated region
    $region69: #{gencoder_autoencoder_forward.1} parent=5 // pred_check
      _
    $region70: #{gencoder_autoencoder_forward.1} parent=5 // pred_check_branch
      %393 = sbr.rel (%p390) target = $region72
    $region71: #{gencoder_autoencoder_forward.1} parent=5 // pred_region
      %s394 = ssub.s32 %s21, 1
      %p395 = scmp.lt.s32.totalorder %s26, 1
      %s396 = scalar_select %p395, %s26, 1
      %s397 = smul.addr %s396, 2
      %s398 = smul.addr %s397, 8
      %s399 = scalar_lea.vmem %s0, %s398
      %p400 = pneg %p47
      %p401 = pneg %p44
      %p402 = pneg %p68
      %p403 = pneg %p65
      %p404 = pneg %p89
      %p405 = pneg %p86
      %p406 = pneg %p110
      %p407 = pneg %p107
      %p408 = pneg %p131
      %p409 = pneg %p128
      %p410 = pneg %p152
      %p411 = pneg %p149
      %p412 = pneg %p173
      %p413 = pneg %p170
      %p414 = pneg %p194
      %p415 = pneg %p191
      %p416 = pneg %p215
      %p417 = pneg %p212
      %p418 = pneg %p236
      %p419 = pneg %p233
      %p420 = pneg %p257
      %p421 = pneg %p254
      %p422 = pneg %p278
      %p423 = pneg %p275
      %p424 = pneg %p299
      %p425 = pneg %p296
      %p426 = pneg %p325
      %p427 = pneg %p322
      %p428 = scmp.lt.s32.totalorder %s26, 1
      %s429 = scalar_select %p428, %s26, 1
      %s430 = smul.addr %s429, 2
      %s431 = smul.addr %s430, 8
      %s432 = scalar_lea.vmem %s13, %s431
      %p433 = scmp.lt.s32.totalorder %s26, 1
      %s434 = scalar_select %p433, %s26, 1
      %s435 = smul.addr %s434, 2
      %s436 = smul.addr %s435, 8
      %s437 = scalar_lea.vmem %s0, %s436
      %p438 = scmp.lt.s32.totalorder %s26, 1
      %s439 = scalar_select %p438, %s26, 1
      %s440 = smul.addr %s439, 2
      %s441 = smul.addr %s440, 8
      %s442 = scalar_lea.vmem %s13, %s441
      %vm443 = vcmask 7168
      %444 = vst.msk [vmem:[#allocation2] sm:$0xff] %vm443, 0.0
      %445 = vst.msk [vmem:[#allocation2 + $0x8] sm:$0xff] %vm443, 0.0
      %vm446 = vcmask 3072
      %447 = vst.msk [vmem:[#allocation2 + $0x10] sm:$0xf] %vm446, 0.0
      %v448 = vld [vmem:[%s437] sm:$0xff]
      %v449 = vld [vmem:[%s437 + $0x8] sm:$0xff]
      %450 = vst.msk [vmem:[#allocation2 + $0x2] sm:$0xff] %vm443, %v448
      %451 = vst.msk [vmem:[#allocation2 + $0xa] sm:$0xff] %vm443, %v449
      %v452 = vld [vmem:[#allocation2] sm:$0xff]
      %v453 = vld [vmem:[#allocation2 + $0x8] sm:$0xff]
      %v454 = vld [vmem:[#allocation2 + $0x1] sm:$0xff]
      %v455 = vld [vmem:[#allocation2 + $0x9] sm:$0xff]
      %v456 = vld [vmem:[#allocation2 + $0x2] sm:$0xff]
      %v457 = vld [vmem:[#allocation2 + $0xa] sm:$0xff]
      %v458 = vld [vmem:[#allocation2 + $0x3] sm:$0xff]
      %v459 = vld [vmem:[#allocation2 + $0xb] sm:$0xff]
      %v460 = vld [vmem:[#allocation2 + $0x4] sm:$0xff]
      %v461 = vld [vmem:[#allocation2 + $0xc] sm:$0xff]
      %464 = vrot.lane.b32.xlu0 %v454, 1
      %v465 = vpop.permute.xlu0 %464
      %466 = vrot.lane.b32.xlu0 %v455, 1
      %v467 = vpop.permute.xlu0 %466
      %472 = vrot.lane.b32.xlu0 %v456, 2
      %v473 = vpop.permute.xlu0 %472
      %474 = vrot.lane.b32.xlu0 %v457, 2
      %v475 = vpop.permute.xlu0 %474
      %480 = vrot.lane.b32.xlu0 %v458, 3
      %v481 = vpop.permute.xlu0 %480
      %482 = vrot.lane.b32.xlu0 %v459, 3
      %v483 = vpop.permute.xlu0 %482
      %488 = vrot.lane.b32.xlu0 %v460, 4
      %v489 = vpop.permute.xlu0 %488
      %490 = vrot.lane.b32.xlu0 %v461, 4
      %v491 = vpop.permute.xlu0 %490
      %v494 = vsel %vm443, %v452, %v465
      %v495 = vsel %vm443, %v453, %v467
      %vm496 = vcmask 15360
      %v497 = vsel %vm496, %v494, %v473
      %v498 = vsel %vm496, %v495, %v475
      %vm499 = vcmask 23552
      %v500 = vsel %vm499, %v497, %v481
      %v501 = vsel %vm499, %v498, %v483
      %vm502 = vcmask 31744
      %v503 = vsel %vm502, %v500, %v489
      %v504 = vsel %vm502, %v501, %v491
      %v505 = vld [vmem:[%s1] sm:$0x1f]
      %v506 = vld [vmem:[%s2] sm:$0x1]
      %v508 = vlaneseq
      %v509 = vshrl.u32 %v508, 7
      %v510 = vsub.s32 0, %v509
      %v511 = vrot.slane %v506, %v510
      %vm513 = vcmask 39936
      %v515 = vsel %vm513, %v503, 0
      %v518 = vsel %vm513, %v504, 0
      %vm520 = vcmask 1044480
      %v522 = vsel %vm520, %v505, 0
      %524 = vmatprep.subr.mxu0 0.0
      %525 = vmatpush1.msra.mxu0 %v522
      %526 = vmatprep.subr.mxu0 0.0
      %527 = vmatpush1.msra.mxu0 0.0
      %528 = vmatprep.subr.mxu0 0.0
      %529 = vmatpush1.msra.mxu0 0.0
      %530 = vmatprep.subr.mxu0 0.0
      %531 = vmatpush1.msra.mxu0 0.0
      %532 = vmatprep.subr.mxu0 0.0
      %533 = vmatpush1.msra.mxu0 0.0
      %534 = vmatprep.subr.mxu0 0.0
      %535 = vmatpush1.msra.mxu0 0.0
      %536 = vmatprep.subr.mxu0 0.0
      %537 = vmatpush1.msra.mxu0 0.0
      %538 = vmatprep.subr.mxu0 0.0
      %539 = vmatpush1.msra.mxu0 0.0
      %540 = vmatprep.subr.mxu0 0.0
      %541 = vmatpush1.msra.mxu0 0.0
      %542 = vmatprep.subr.mxu0 0.0
      %543 = vmatpush1.msra.mxu0 0.0
      %544 = vmatprep.subr.mxu0 0.0
      %545 = vmatpush1.msra.mxu0 0.0
      %546 = vmatprep.subr.mxu0 0.0
      %547 = vmatpush1.msra.mxu0 0.0
      %548 = vmatprep.subr.mxu0 0.0
      %549 = vmatpush1.msra.mxu0 0.0
      %550 = vmatprep.subr.mxu0 0.0
      %551 = vmatpush1.msra.mxu0 0.0
      %552 = vmatprep.subr.mxu0 0.0
      %553 = vmatpush1.msra.mxu0 0.0
      %554 = vmatprep.subr.mxu0 0.0
      %555 = vmatpush1.msra.mxu0 0.0
      %556 = vmatprep.subr.mxu0 0.0
      %557 = vmatpush1.msra.mxu0 0.0
      %558 = vmatprep.subr.mxu0 0.0
      %559 = vmatpush1.msra.mxu0 0.0
      %560 = vmatprep.subr.mxu0 0.0
      %561 = vmatpush1.msra.mxu0 0.0
      %562 = vmatprep.subr.mxu0 0.0
      %563 = vmatpush1.msra.mxu0 0.0
      %564 = vmatprep.subr.mxu0 0.0
      %565 = vmatpush1.msra.mxu0 0.0
      %566 = vmatprep.subr.mxu0 0.0
      %567 = vmatpush1.msra.mxu0 0.0
      %568 = vmatprep.subr.mxu0 0.0
      %569 = vmatpush1.msra.mxu0 0.0
      %570 = vmatprep.subr.mxu0 0.0
      %571 = vmatpush1.msra.mxu0 0.0
      %572 = vmatprep.subr.mxu0 0.0
      %573 = vmatpush1.msra.mxu0 0.0
      %574 = vmatprep.subr.mxu0 0.0
      %575 = vmatpush1.msra.mxu0 0.0
      %576 = vmatprep.subr.mxu0 0.0
      %577 = vmatpush1.msra.mxu0 0.0
      %578 = vmatprep.subr.mxu0 0.0
      %579 = vmatpush1.msra.mxu0 0.0
      %580 = vmatprep.subr.mxu0 0.0
      %581 = vmatpush1.msra.mxu0 0.0
      %582 = vmatprep.subr.mxu0 0.0
      %583 = vmatpush1.msra.mxu0 0.0
      %584 = vmatprep.subr.mxu0 0.0
      %585 = vmatpush1.msra.mxu0 0.0
      %586 = vmatprep.subr.mxu0 0.0
      %587 = vmatpush1.msra.mxu0 0.0
      %588 = vmatprep.mubr.f32.mxu0 0.0
      %589 = vmatmul.mubr.f32.gmra.mrb[0].mxu0 %v515
      %v590 = vpop.f32.mrb[0].mxu0
      %v591 = vadd.f32 %v511, %v590
      %v592 = vpop.f32.mrb[0].mxu0
      %593 = vmatprep.mubr.f32.mxu0 0.0
      %594 = vmatmul.mubr.f32.gmra.mrb[0].mxu0 %v518
      %v595 = vpop.f32.mrb[0].mxu0
      %v596 = vadd.f32 %v511, %v595
      %v597 = vpop.f32.mrb[0].mxu0
      %598 = vdwg.mxu0
      %v599 = vmax.f32 %v591, 0.0
      %v600 = vmax.f32 %v596, 0.0
      %vm601 = vcmask 261120
      %602 = vst.msk [vmem:[#allocation3] sm:$0xff] %vm601, 0.0
      %603 = vst.msk [vmem:[#allocation3 + $0x8] sm:$0xff] %vm601, 0.0
      %vm604 = vcmask 257024
      %605 = vst.msk [vmem:[#allocation3 + $0x10] sm:$0xf] %vm604, 0.0
      %606 = vst.msk [vmem:[#allocation3 + $0x2] sm:$0xff] %vm601, %v599
      %607 = vst.msk [vmem:[#allocation3 + $0xa] sm:$0xff] %vm601, %v600
      %v608 = vld [vmem:[#allocation3] sm:$0xff]
      %v609 = vld [vmem:[#allocation3 + $0x8] sm:$0xff]
      %v610 = vld [vmem:[#allocation3 + $0x1] sm:$0xff]
      %v611 = vld [vmem:[#allocation3 + $0x9] sm:$0xff]
      %v612 = vld [vmem:[#allocation3 + $0x2] sm:$0xff]
      %v613 = vld [vmem:[#allocation3 + $0xa] sm:$0xff]
      %v614 = vld [vmem:[#allocation3 + $0x3] sm:$0xff]
      %v615 = vld [vmem:[#allocation3 + $0xb] sm:$0xff]
      %v616 = vld [vmem:[#allocation3 + $0x4] sm:$0xff]
      %v617 = vld [vmem:[#allocation3 + $0xc] sm:$0xff]
      %620 = vrot.lane.b32.xlu0 %v610, 32
      %v621 = vpop.permute.xlu0 %620
      %622 = vrot.lane.b32.xlu0 %v611, 32
      %v623 = vpop.permute.xlu0 %622
      %628 = vrot.lane.b32.xlu0 %v612, 64
      %v629 = vpop.permute.xlu0 %628
      %630 = vrot.lane.b32.xlu0 %v613, 64
      %v631 = vpop.permute.xlu0 %630
      %636 = vrot.lane.b32.xlu0 %v614, 96
      %v637 = vpop.permute.xlu0 %636
      %638 = vrot.lane.b32.xlu0 %v615, 96
      %v639 = vpop.permute.xlu0 %638
      %v642 = vsel %vm601, %v608, %v621
      %v643 = vsel %vm601, %v609, %v623
      %vm644 = vcmask 523264
      %v645 = vsel %vm644, %v642, %v629
      %v646 = vsel %vm644, %v643, %v631
      %vm647 = vcmask 785408
      %v648 = vsel %vm647, %v645, %v637
      %v649 = vsel %vm647, %v646, %v639
      %v650 = vld [vmem:[%s3] sm:$0xff]
      %v651 = vld [vmem:[%s3 + $0x8] sm:$0xff]
      %v652 = vld [vmem:[%s3 + $0x10] sm:$0xff]
      %v653 = vld [vmem:[%s3 + $0x18] sm:$0xff]
      %v654 = vld [vmem:[%s3 + $0x20] sm:$0xff]
      %v655 = vld [vmem:[%s3 + $0x28] sm:$0xff]
      %v656 = vld [vmem:[%s3 + $0x30] sm:$0xff]
      %v657 = vld [vmem:[%s3 + $0x38] sm:$0xff]
      %v658 = vld [vmem:[%s3 + $0x40] sm:$0xff]
      %v659 = vld [vmem:[%s3 + $0x48] sm:$0xff]
      %v660 = vld [vmem:[%s3 + $0x50] sm:$0xff]
      %v661 = vld [vmem:[%s3 + $0x58] sm:$0xff]
      %v662 = vld [vmem:[%s3 + $0x60] sm:$0xff]
      %v663 = vld [vmem:[%s3 + $0x68] sm:$0xff]
      %v664 = vld [vmem:[%s3 + $0x70] sm:$0xff]
      %v665 = vld [vmem:[%s3 + $0x78] sm:$0xff]
      %v666 = vld [vmem:[%s3 + $0x80] sm:$0xff]
      %v667 = vld [vmem:[%s3 + $0x88] sm:$0xff]
      %v668 = vld [vmem:[%s3 + $0x90] sm:$0xff]
      %v669 = vld [vmem:[%s3 + $0x98] sm:$0xff]
      %v670 = vld [vmem:[%s4] sm:$0x1]
      %v672 = vlaneseq
      %v673 = vshrl.u32 %v672, 7
      %v674 = vsub.s32 0, %v673
      %v675 = vrot.slane %v670, %v674
      %v678 = vsel %vm601, %v616, 0
      %v681 = vsel %vm601, %v617, 0
      %683 = vmatprep.subr.mxu0 0.0
      %684 = vmatpush1.msra.mxu0 %v650
      %685 = vmatprep.subr.mxu0 0.0
      %686 = vmatpush1.msra.mxu0 %v651
      %687 = vmatprep.subr.mxu0 0.0
      %688 = vmatpush1.msra.mxu0 %v652
      %689 = vmatprep.subr.mxu0 0.0
      %690 = vmatpush1.msra.mxu0 %v653
      %691 = vmatprep.subr.mxu0 0.0
      %692 = vmatpush1.msra.mxu0 %v654
      %693 = vmatprep.subr.mxu0 0.0
      %694 = vmatpush1.msra.mxu0 %v655
      %695 = vmatprep.subr.mxu0 0.0
      %696 = vmatpush1.msra.mxu0 %v656
      %697 = vmatprep.subr.mxu0 0.0
      %698 = vmatpush1.msra.mxu0 %v657
      %699 = vmatprep.subr.mxu0 0.0
      %700 = vmatpush1.msra.mxu0 %v658
      %701 = vmatprep.subr.mxu0 0.0
      %702 = vmatpush1.msra.mxu0 %v659
      %703 = vmatprep.subr.mxu0 0.0
      %704 = vmatpush1.msra.mxu0 %v660
      %705 = vmatprep.subr.mxu0 0.0
      %706 = vmatpush1.msra.mxu0 %v661
      %707 = vmatprep.subr.mxu0 0.0
      %708 = vmatpush1.msra.mxu0 %v662
      %709 = vmatprep.subr.mxu0 0.0
      %710 = vmatpush1.msra.mxu0 %v663
      %711 = vmatprep.subr.mxu0 0.0
      %712 = vmatpush1.msra.mxu0 %v664
      %713 = vmatprep.subr.mxu0 0.0
      %714 = vmatpush1.msra.mxu0 %v665
      %715 = vmatprep.subr.mxu0 0.0
      %716 = vmatpush1.msra.mxu0 %v666
      %717 = vmatprep.subr.mxu0 0.0
      %718 = vmatpush1.msra.mxu0 %v667
      %719 = vmatprep.subr.mxu0 0.0
      %720 = vmatpush1.msra.mxu0 %v668
      %721 = vmatprep.subr.mxu0 0.0
      %722 = vmatpush1.msra.mxu0 %v669
      %723 = vmatprep.subr.mxu0 0.0
      %724 = vmatpush1.msra.mxu0 0.0
      %725 = vmatprep.subr.mxu0 0.0
      %726 = vmatpush1.msra.mxu0 0.0
      %727 = vmatprep.subr.mxu0 0.0
      %728 = vmatpush1.msra.mxu0 0.0
      %729 = vmatprep.subr.mxu0 0.0
      %730 = vmatpush1.msra.mxu0 0.0
      %731 = vmatprep.subr.mxu0 0.0
      %732 = vmatpush1.msra.mxu0 0.0
      %733 = vmatprep.subr.mxu0 0.0
      %734 = vmatpush1.msra.mxu0 0.0
      %735 = vmatprep.subr.mxu0 0.0
      %736 = vmatpush1.msra.mxu0 0.0
      %737 = vmatprep.subr.mxu0 0.0
      %738 = vmatpush1.msra.mxu0 0.0
      %739 = vmatprep.subr.mxu0 0.0
      %740 = vmatpush1.msra.mxu0 0.0
      %741 = vmatprep.subr.mxu0 0.0
      %742 = vmatpush1.msra.mxu0 0.0
      %743 = vmatprep.subr.mxu0 0.0
      %744 = vmatpush1.msra.mxu0 0.0
      %745 = vmatprep.subr.mxu0 0.0
      %746 = vmatpush1.msra.mxu0 0.0
      %747 = vmatprep.mubr.f32.mxu0 %v678
      %748 = vmatmul.mubr.f32.gmra.mrb[0].mxu0 %v648
      %v749 = vpop.f32.mrb[0].mxu0
      %v750 = vadd.f32 %v675, %v749
      %v751 = vpop.f32.mrb[0].mxu0
      %752 = vmatprep.mubr.f32.mxu0 %v681
      %753 = vmatmul.mubr.f32.gmra.mrb[0].mxu0 %v649
      %v754 = vpop.f32.mrb[0].mxu0
      %v755 = vadd.f32 %v675, %v754
      %v756 = vpop.f32.mrb[0].mxu0
      %757 = vdwg.mxu0
      %v758 = vmax.f32 %v750, 0.0
      %v759 = vmax.f32 %v755, 0.0
      %760 = vst.msk [vmem:[#allocation4] sm:$0xff] %vm644, %v758
      %761 = vst.msk [vmem:[#allocation4 + $0x8] sm:$0xff] %vm644, %v759
      %v762 = vld [vmem:[#allocation4] ss:$2 sm:$0xff]
      %s763 = scalar_lea.vmem [#allocation4], 1
      %v764 = vld [vmem:[%s763] ss:$2 sm:$0xff]
      %v765 = vmax.f32 %v762, %v764
      %v766 = vld [vmem:[%s6] sm:$0x1]
      %v767 = vld [vmem:[%s5] sm:$0xff]
      %v768 = vld [vmem:[%s5 + $0x8] sm:$0xff]
      %v769 = vld [vmem:[%s5 + $0x10] sm:$0xff]
      %v770 = vld [vmem:[%s5 + $0x18] sm:$0xff]
      %v771 = vld [vmem:[%s5 + $0x20] sm:$0xff]
      %v772 = vld [vmem:[%s5 + $0x28] sm:$0xff]
      %v773 = vld [vmem:[%s5 + $0x30] sm:$0xff]
      %v774 = vld [vmem:[%s5 + $0x38] sm:$0xff]
      %v776 = vsel %vm644, %v765, 0
      %778 = vmatprep.subr.mxu0 0.0
      %779 = vmatpush1.msra.mxu0 %v767
      %780 = vmatprep.subr.mxu0 0.0
      %781 = vmatpush1.msra.mxu0 %v768
      %782 = vmatprep.subr.mxu0 0.0
      %783 = vmatpush1.msra.mxu0 %v769
      %784 = vmatprep.subr.mxu0 0.0
      %785 = vmatpush1.msra.mxu0 %v770
      %786 = vmatprep.subr.mxu0 0.0
      %787 = vmatpush1.msra.mxu0 %v771
      %788 = vmatprep.subr.mxu0 0.0
      %789 = vmatpush1.msra.mxu0 %v772
      %790 = vmatprep.subr.mxu0 0.0
      %791 = vmatpush1.msra.mxu0 %v773
      %792 = vmatprep.subr.mxu0 0.0
      %793 = vmatpush1.msra.mxu0 %v774
      %794 = vmatprep.subr.mxu0 0.0
      %795 = vmatpush1.msra.mxu0 0.0
      %796 = vmatprep.subr.mxu0 0.0
      %797 = vmatpush1.msra.mxu0 0.0
      %798 = vmatprep.subr.mxu0 0.0
      %799 = vmatpush1.msra.mxu0 0.0
      %800 = vmatprep.subr.mxu0 0.0
      %801 = vmatpush1.msra.mxu0 0.0
      %802 = vmatprep.subr.mxu0 0.0
      %803 = vmatpush1.msra.mxu0 0.0
      %804 = vmatprep.subr.mxu0 0.0
      %805 = vmatpush1.msra.mxu0 0.0
      %806 = vmatprep.subr.mxu0 0.0
      %807 = vmatpush1.msra.mxu0 0.0
      %808 = vmatprep.subr.mxu0 0.0
      %809 = vmatpush1.msra.mxu0 0.0
      %810 = vmatprep.subr.mxu0 0.0
      %811 = vmatpush1.msra.mxu0 0.0
      %812 = vmatprep.subr.mxu0 0.0
      %813 = vmatpush1.msra.mxu0 0.0
      %814 = vmatprep.subr.mxu0 0.0
      %815 = vmatpush1.msra.mxu0 0.0
      %816 = vmatprep.subr.mxu0 0.0
      %817 = vmatpush1.msra.mxu0 0.0
      %818 = vmatprep.subr.mxu0 0.0
      %819 = vmatpush1.msra.mxu0 0.0
      %820 = vmatprep.subr.mxu0 0.0
      %821 = vmatpush1.msra.mxu0 0.0
      %822 = vmatprep.subr.mxu0 0.0
      %823 = vmatpush1.msra.mxu0 0.0
      %824 = vmatprep.subr.mxu0 0.0
      %825 = vmatpush1.msra.mxu0 0.0
      %826 = vmatprep.subr.mxu0 0.0
      %827 = vmatpush1.msra.mxu0 0.0
      %828 = vmatprep.subr.mxu0 0.0
      %829 = vmatpush1.msra.mxu0 0.0
      %830 = vmatprep.subr.mxu0 0.0
      %831 = vmatpush1.msra.mxu0 0.0
      %832 = vmatprep.subr.mxu0 0.0
      %833 = vmatpush1.msra.mxu0 0.0
      %834 = vmatprep.subr.mxu0 0.0
      %835 = vmatpush1.msra.mxu0 0.0
      %836 = vmatprep.subr.mxu0 0.0
      %837 = vmatpush1.msra.mxu0 0.0
      %838 = vmatprep.subr.mxu0 0.0
      %839 = vmatpush1.msra.mxu0 0.0
      %840 = vmatprep.subr.mxu0 0.0
      %841 = vmatpush1.msra.mxu0 0.0
      %842 = vmatprep.mubr.f32.mxu0 0.0
      %843 = vmatmul.mubr.f32.gmra.mrb[0].mxu0 %v776
      %v844 = vpop.f32.mrb[0].mxu0
      %v845 = vadd.f32 0.0, %v844
      %v846 = vpop.f32.mrb[0].mxu0
      %847 = vdwg.mxu0
      %v848 = vadd.f32 %v766, %v845
      %s849 = scalar_lea.vmem %s5, 64
      %v850 = vld [vmem:[%s849] sm:$0xff]
      %v851 = vld [vmem:[%s849 + $0x8] sm:$0xff]
      %v852 = vld [vmem:[%s849 + $0x10] sm:$0xff]
      %v853 = vld [vmem:[%s849 + $0x18] sm:$0xff]
      %v854 = vld [vmem:[%s849 + $0x20] sm:$0xff]
      %v855 = vld [vmem:[%s849 + $0x28] sm:$0xff]
      %v856 = vld [vmem:[%s849 + $0x30] sm:$0xff]
      %v857 = vld [vmem:[%s849 + $0x38] sm:$0xff]
      %v858 = vrot.slane %v765, 1
      %v859 = vsel %vm644, %v858, 0
      %861 = vmatprep.subr.mxu0 0.0
      %862 = vmatpush1.msra.mxu0 %v850
      %863 = vmatprep.subr.mxu0 0.0
      %864 = vmatpush1.msra.mxu0 %v851
      %865 = vmatprep.subr.mxu0 0.0
      %866 = vmatpush1.msra.mxu0 %v852
      %867 = vmatprep.subr.mxu0 0.0
      %868 = vmatpush1.msra.mxu0 %v853
      %869 = vmatprep.subr.mxu0 0.0
      %870 = vmatpush1.msra.mxu0 %v854
      %871 = vmatprep.subr.mxu0 0.0
      %872 = vmatpush1.msra.mxu0 %v855
      %873 = vmatprep.subr.mxu0 0.0
      %874 = vmatpush1.msra.mxu0 %v856
      %875 = vmatprep.subr.mxu0 0.0
      %876 = vmatpush1.msra.mxu0 %v857
      %877 = vmatprep.subr.mxu0 0.0
      %878 = vmatpush1.msra.mxu0 0.0
      %879 = vmatprep.subr.mxu0 0.0
      %880 = vmatpush1.msra.mxu0 0.0
      %881 = vmatprep.subr.mxu0 0.0
      %882 = vmatpush1.msra.mxu0 0.0
      %883 = vmatprep.subr.mxu0 0.0
      %884 = vmatpush1.msra.mxu0 0.0
      %885 = vmatprep.subr.mxu0 0.0
      %886 = vmatpush1.msra.mxu0 0.0
      %887 = vmatprep.subr.mxu0 0.0
      %888 = vmatpush1.msra.mxu0 0.0
      %889 = vmatprep.subr.mxu0 0.0
      %890 = vmatpush1.msra.mxu0 0.0
      %891 = vmatprep.subr.mxu0 0.0
      %892 = vmatpush1.msra.mxu0 0.0
      %893 = vmatprep.subr.mxu0 0.0
      %894 = vmatpush1.msra.mxu0 0.0
      %895 = vmatprep.subr.mxu0 0.0
      %896 = vmatpush1.msra.mxu0 0.0
      %897 = vmatprep.subr.mxu0 0.0
      %898 = vmatpush1.msra.mxu0 0.0
      %899 = vmatprep.subr.mxu0 0.0
      %900 = vmatpush1.msra.mxu0 0.0
      %901 = vmatprep.subr.mxu0 0.0
      %902 = vmatpush1.msra.mxu0 0.0
      %903 = vmatprep.subr.mxu0 0.0
      %904 = vmatpush1.msra.mxu0 0.0
      %905 = vmatprep.subr.mxu0 0.0
      %906 = vmatpush1.msra.mxu0 0.0
      %907 = vmatprep.subr.mxu0 0.0
      %908 = vmatpush1.msra.mxu0 0.0
      %909 = vmatprep.subr.mxu0 0.0
      %910 = vmatpush1.msra.mxu0 0.0
      %911 = vmatprep.subr.mxu0 0.0
      %912 = vmatpush1.msra.mxu0 0.0
      %913 = vmatprep.subr.mxu0 0.0
      %914 = vmatpush1.msra.mxu0 0.0
      %915 = vmatprep.subr.mxu0 0.0
      %916 = vmatpush1.msra.mxu0 0.0
      %917 = vmatprep.subr.mxu0 0.0
      %918 = vmatpush1.msra.mxu0 0.0
      %919 = vmatprep.subr.mxu0 0.0
      %920 = vmatpush1.msra.mxu0 0.0
      %921 = vmatprep.subr.mxu0 0.0
      %922 = vmatpush1.msra.mxu0 0.0
      %923 = vmatprep.subr.mxu0 0.0
      %924 = vmatpush1.msra.mxu0 0.0
      %925 = vmatprep.mubr.f32.mxu0 0.0
      %926 = vmatmul.mubr.f32.gmra.mrb[0].mxu0 %v859
      %v927 = vpop.f32.mrb[0].mxu0
      %v928 = vadd.f32 0.0, %v927
      %v929 = vpop.f32.mrb[0].mxu0
      %930 = vdwg.mxu0
      %v931 = vadd.f32 %v848, %v928
      %s932 = scalar_lea.vmem %s5, 128
      %v933 = vld [vmem:[%s932] sm:$0xff]
      %v934 = vld [vmem:[%s932 + $0x8] sm:$0xff]
      %v935 = vld [vmem:[%s932 + $0x10] sm:$0xff]
      %v936 = vld [vmem:[%s932 + $0x18] sm:$0xff]
      %v937 = vld [vmem:[%s932 + $0x20] sm:$0xff]
      %v938 = vld [vmem:[%s932 + $0x28] sm:$0xff]
      %v939 = vld [vmem:[%s932 + $0x30] sm:$0xff]
      %v940 = vld [vmem:[%s932 + $0x38] sm:$0xff]
      %v941 = vrot.slane %v765, 2
      %v942 = vsel %vm644, %v941, 0
      %944 = vmatprep.subr.mxu0 0.0
      %945 = vmatpush1.msra.mxu0 %v933
      %946 = vmatprep.subr.mxu0 0.0
      %947 = vmatpush1.msra.mxu0 %v934
      %948 = vmatprep.subr.mxu0 0.0
      %949 = vmatpush1.msra.mxu0 %v935
      %950 = vmatprep.subr.mxu0 0.0
      %951 = vmatpush1.msra.mxu0 %v936
      %952 = vmatprep.subr.mxu0 0.0
      %953 = vmatpush1.msra.mxu0 %v937
      %954 = vmatprep.subr.mxu0 0.0
      %955 = vmatpush1.msra.mxu0 %v938
      %956 = vmatprep.subr.mxu0 0.0
      %957 = vmatpush1.msra.mxu0 %v939
      %958 = vmatprep.subr.mxu0 0.0
      %959 = vmatpush1.msra.mxu0 %v940
      %960 = vmatprep.subr.mxu0 0.0
      %961 = vmatpush1.msra.mxu0 0.0
      %962 = vmatprep.subr.mxu0 0.0
      %963 = vmatpush1.msra.mxu0 0.0
      %964 = vmatprep.subr.mxu0 0.0
      %965 = vmatpush1.msra.mxu0 0.0
      %966 = vmatprep.subr.mxu0 0.0
      %967 = vmatpush1.msra.mxu0 0.0
      %968 = vmatprep.subr.mxu0 0.0
      %969 = vmatpush1.msra.mxu0 0.0
      %970 = vmatprep.subr.mxu0 0.0
      %971 = vmatpush1.msra.mxu0 0.0
      %972 = vmatprep.subr.mxu0 0.0
      %973 = vmatpush1.msra.mxu0 0.0
      %974 = vmatprep.subr.mxu0 0.0
      %975 = vmatpush1.msra.mxu0 0.0
      %976 = vmatprep.subr.mxu0 0.0
      %977 = vmatpush1.msra.mxu0 0.0
      %978 = vmatprep.subr.mxu0 0.0
      %979 = vmatpush1.msra.mxu0 0.0
      %980 = vmatprep.subr.mxu0 0.0
      %981 = vmatpush1.msra.mxu0 0.0
      %982 = vmatprep.subr.mxu0 0.0
      %983 = vmatpush1.msra.mxu0 0.0
      %984 = vmatprep.subr.mxu0 0.0
      %985 = vmatpush1.msra.mxu0 0.0
      %986 = vmatprep.subr.mxu0 0.0
      %987 = vmatpush1.msra.mxu0 0.0
      %988 = vmatprep.subr.mxu0 0.0
      %989 = vmatpush1.msra.mxu0 0.0
      %990 = vmatprep.subr.mxu0 0.0
      %991 = vmatpush1.msra.mxu0 0.0
      %992 = vmatprep.subr.mxu0 0.0
      %993 = vmatpush1.msra.mxu0 0.0
      %994 = vmatprep.subr.mxu0 0.0
      %995 = vmatpush1.msra.mxu0 0.0
      %996 = vmatprep.subr.mxu0 0.0
      %997 = vmatpush1.msra.mxu0 0.0
      %998 = vmatprep.subr.mxu0 0.0
      %999 = vmatpush1.msra.mxu0 0.0
      %1000 = vmatprep.subr.mxu0 0.0
      %1001 = vmatpush1.msra.mxu0 0.0
      %1002 = vmatprep.subr.mxu0 0.0
      %1003 = vmatpush1.msra.mxu0 0.0
      %1004 = vmatprep.subr.mxu0 0.0
      %1005 = vmatpush1.msra.mxu0 0.0
      %1006 = vmatprep.subr.mxu0 0.0
      %1007 = vmatpush1.msra.mxu0 0.0
      %1008 = vmatprep.mubr.f32.mxu0 0.0
      %1009 = vmatmul.mubr.f32.gmra.mrb[0].mxu0 %v942
      %v1010 = vpop.f32.mrb[0].mxu0
      %v1011 = vadd.f32 0.0, %v1010
      %v1012 = vpop.f32.mrb[0].mxu0
      %1013 = vdwg.mxu0
      %v1014 = vadd.f32 %v931, %v1011
      %s1015 = scalar_lea.vmem %s5, 192
      %v1016 = vld [vmem:[%s1015] sm:$0xff]
      %v1017 = vld [vmem:[%s1015 + $0x8] sm:$0xff]
      %v1018 = vld [vmem:[%s1015 + $0x10] sm:$0xff]
      %v1019 = vld [vmem:[%s1015 + $0x18] sm:$0xff]
      %v1020 = vld [vmem:[%s1015 + $0x20] sm:$0xff]
      %v1021 = vld [vmem:[%s1015 + $0x28] sm:$0xff]
      %v1022 = vld [vmem:[%s1015 + $0x30] sm:$0xff]
      %v1023 = vld [vmem:[%s1015 + $0x38] sm:$0xff]
      %v1024 = vrot.slane %v765, 3
      %v1025 = vsel %vm644, %v1024, 0
      %1027 = vmatprep.subr.mxu0 0.0
      %1028 = vmatpush1.msra.mxu0 %v1016
      %1029 = vmatprep.subr.mxu0 0.0
      %1030 = vmatpush1.msra.mxu0 %v1017
      %1031 = vmatprep.subr.mxu0 0.0
      %1032 = vmatpush1.msra.mxu0 %v1018
      %1033 = vmatprep.subr.mxu0 0.0
      %1034 = vmatpush1.msra.mxu0 %v1019
      %1035 = vmatprep.subr.mxu0 0.0
      %1036 = vmatpush1.msra.mxu0 %v1020
      %1037 = vmatprep.subr.mxu0 0.0
      %1038 = vmatpush1.msra.mxu0 %v1021
      %1039 = vmatprep.subr.mxu0 0.0
      %1040 = vmatpush1.msra.mxu0 %v1022
      %1041 = vmatprep.subr.mxu0 0.0
      %1042 = vmatpush1.msra.mxu0 %v1023
      %1043 = vmatprep.subr.mxu0 0.0
      %1044 = vmatpush1.msra.mxu0 0.0
      %1045 = vmatprep.subr.mxu0 0.0
      %1046 = vmatpush1.msra.mxu0 0.0
      %1047 = vmatprep.subr.mxu0 0.0
      %1048 = vmatpush1.msra.mxu0 0.0
      %1049 = vmatprep.subr.mxu0 0.0
      %1050 = vmatpush1.msra.mxu0 0.0
      %1051 = vmatprep.subr.mxu0 0.0
      %1052 = vmatpush1.msra.mxu0 0.0
      %1053 = vmatprep.subr.mxu0 0.0
      %1054 = vmatpush1.msra.mxu0 0.0
      %1055 = vmatprep.subr.mxu0 0.0
      %1056 = vmatpush1.msra.mxu0 0.0
      %1057 = vmatprep.subr.mxu0 0.0
      %1058 = vmatpush1.msra.mxu0 0.0
      %1059 = vmatprep.subr.mxu0 0.0
      %1060 = vmatpush1.msra.mxu0 0.0
      %1061 = vmatprep.subr.mxu0 0.0
      %1062 = vmatpush1.msra.mxu0 0.0
      %1063 = vmatprep.subr.mxu0 0.0
      %1064 = vmatpush1.msra.mxu0 0.0
      %1065 = vmatprep.subr.mxu0 0.0
      %1066 = vmatpush1.msra.mxu0 0.0
      %1067 = vmatprep.subr.mxu0 0.0
      %1068 = vmatpush1.msra.mxu0 0.0
      %1069 = vmatprep.subr.mxu0 0.0
      %1070 = vmatpush1.msra.mxu0 0.0
      %1071 = vmatprep.subr.mxu0 0.0
      %1072 = vmatpush1.msra.mxu0 0.0
      %1073 = vmatprep.subr.mxu0 0.0
      %1074 = vmatpush1.msra.mxu0 0.0
      %1075 = vmatprep.subr.mxu0 0.0
      %1076 = vmatpush1.msra.mxu0 0.0
      %1077 = vmatprep.subr.mxu0 0.0
      %1078 = vmatpush1.msra.mxu0 0.0
      %1079 = vmatprep.subr.mxu0 0.0
      %1080 = vmatpush1.msra.mxu0 0.0
      %1081 = vmatprep.subr.mxu0 0.0
      %1082 = vmatpush1.msra.mxu0 0.0
      %1083 = vmatprep.subr.mxu0 0.0
      %1084 = vmatpush1.msra.mxu0 0.0
      %1085 = vmatprep.subr.mxu0 0.0
      %1086 = vmatpush1.msra.mxu0 0.0
      %1087 = vmatprep.subr.mxu0 0.0
      %1088 = vmatpush1.msra.mxu0 0.0
      %1089 = vmatprep.subr.mxu0 0.0
      %1090 = vmatpush1.msra.mxu0 0.0
      %1091 = vmatprep.mubr.f32.mxu0 0.0
      %1092 = vmatmul.mubr.f32.gmra.mrb[0].mxu0 %v1025
      %v1093 = vpop.f32.mrb[0].mxu0
      %v1094 = vadd.f32 0.0, %v1093
      %v1095 = vpop.f32.mrb[0].mxu0
      %1096 = vdwg.mxu0
      %v1097 = vadd.f32 %v1014, %v1094
      %s1098 = scalar_lea.vmem %s5, 256
      %v1099 = vld [vmem:[%s1098] sm:$0xff]
      %v1100 = vld [vmem:[%s1098 + $0x8] sm:$0xff]
      %v1101 = vld [vmem:[%s1098 + $0x10] sm:$0xff]
      %v1102 = vld [vmem:[%s1098 + $0x18] sm:$0xff]
      %v1103 = vld [vmem:[%s1098 + $0x20] sm:$0xff]
      %v1104 = vld [vmem:[%s1098 + $0x28] sm:$0xff]
      %v1105 = vld [vmem:[%s1098 + $0x30] sm:$0xff]
      %v1106 = vld [vmem:[%s1098 + $0x38] sm:$0xff]
      %v1107 = vrot.slane %v765, 4
      %v1108 = vsel %vm644, %v1107, 0
      %1110 = vmatprep.subr.mxu0 0.0
      %1111 = vmatpush1.msra.mxu0 %v1099
      %1112 = vmatprep.subr.mxu0 0.0
      %1113 = vmatpush1.msra.mxu0 %v1100
      %1114 = vmatprep.subr.mxu0 0.0
      %1115 = vmatpush1.msra.mxu0 %v1101
      %1116 = vmatprep.subr.mxu0 0.0
      %1117 = vmatpush1.msra.mxu0 %v1102
      %1118 = vmatprep.subr.mxu0 0.0
      %1119 = vmatpush1.msra.mxu0 %v1103
      %1120 = vmatprep.subr.mxu0 0.0
      %1121 = vmatpush1.msra.mxu0 %v1104
      %1122 = vmatprep.subr.mxu0 0.0
      %1123 = vmatpush1.msra.mxu0 %v1105
      %1124 = vmatprep.subr.mxu0 0.0
      %1125 = vmatpush1.msra.mxu0 %v1106
      %1126 = vmatprep.subr.mxu0 0.0
      %1127 = vmatpush1.msra.mxu0 0.0
      %1128 = vmatprep.subr.mxu0 0.0
      %1129 = vmatpush1.msra.mxu0 0.0
      %1130 = vmatprep.subr.mxu0 0.0
      %1131 = vmatpush1.msra.mxu0 0.0
      %1132 = vmatprep.subr.mxu0 0.0
      %1133 = vmatpush1.msra.mxu0 0.0
      %1134 = vmatprep.subr.mxu0 0.0
      %1135 = vmatpush1.msra.mxu0 0.0
      %1136 = vmatprep.subr.mxu0 0.0
      %1137 = vmatpush1.msra.mxu0 0.0
      %1138 = vmatprep.subr.mxu0 0.0
      %1139 = vmatpush1.msra.mxu0 0.0
      %1140 = vmatprep.subr.mxu0 0.0
      %1141 = vmatpush1.msra.mxu0 0.0
      %1142 = vmatprep.subr.mxu0 0.0
      %1143 = vmatpush1.msra.mxu0 0.0
      %1144 = vmatprep.subr.mxu0 0.0
      %1145 = vmatpush1.msra.mxu0 0.0
      %1146 = vmatprep.subr.mxu0 0.0
      %1147 = vmatpush1.msra.mxu0 0.0
      %1148 = vmatprep.subr.mxu0 0.0
      %1149 = vmatpush1.msra.mxu0 0.0
      %1150 = vmatprep.subr.mxu0 0.0
      %1151 = vmatpush1.msra.mxu0 0.0
      %1152 = vmatprep.subr.mxu0 0.0
      %1153 = vmatpush1.msra.mxu0 0.0
      %1154 = vmatprep.subr.mxu0 0.0
      %1155 = vmatpush1.msra.mxu0 0.0
      %1156 = vmatprep.subr.mxu0 0.0
      %1157 = vmatpush1.msra.mxu0 0.0
      %1158 = vmatprep.subr.mxu0 0.0
      %1159 = vmatpush1.msra.mxu0 0.0
      %1160 = vmatprep.subr.mxu0 0.0
      %1161 = vmatpush1.msra.mxu0 0.0
      %1162 = vmatprep.subr.mxu0 0.0
      %1163 = vmatpush1.msra.mxu0 0.0
      %1164 = vmatprep.subr.mxu0 0.0
      %1165 = vmatpush1.msra.mxu0 0.0
      %1166 = vmatprep.subr.mxu0 0.0
      %1167 = vmatpush1.msra.mxu0 0.0
      %1168 = vmatprep.subr.mxu0 0.0
      %1169 = vmatpush1.msra.mxu0 0.0
      %1170 = vmatprep.subr.mxu0 0.0
      %1171 = vmatpush1.msra.mxu0 0.0
      %1172 = vmatprep.subr.mxu0 0.0
      %1173 = vmatpush1.msra.mxu0 0.0
      %1174 = vmatprep.mubr.f32.mxu0 0.0
      %1175 = vmatmul.mubr.f32.gmra.mrb[0].mxu0 %v1108
      %v1176 = vpop.f32.mrb[0].mxu0
      %v1177 = vadd.f32 0.0, %v1176
      %v1178 = vpop.f32.mrb[0].mxu0
      %1179 = vdwg.mxu0
      %v1180 = vadd.f32 %v1097, %v1177
      %s1181 = scalar_lea.vmem %s5, 320
      %v1182 = vld [vmem:[%s1181] sm:$0xff]
      %v1183 = vld [vmem:[%s1181 + $0x8] sm:$0xff]
      %v1184 = vld [vmem:[%s1181 + $0x10] sm:$0xff]
      %v1185 = vld [vmem:[%s1181 + $0x18] sm:$0xff]
      %v1186 = vld [vmem:[%s1181 + $0x20] sm:$0xff]
      %v1187 = vld [vmem:[%s1181 + $0x28] sm:$0xff]
      %v1188 = vld [vmem:[%s1181 + $0x30] sm:$0xff]
      %v1189 = vld [vmem:[%s1181 + $0x38] sm:$0xff]
      %v1190 = vrot.slane %v765, 5
      %v1191 = vsel %vm644, %v1190, 0
      %1193 = vmatprep.subr.mxu0 0.0
      %1194 = vmatpush1.msra.mxu0 %v1182
      %1195 = vmatprep.subr.mxu0 0.0
      %1196 = vmatpush1.msra.mxu0 %v1183
      %1197 = vmatprep.subr.mxu0 0.0
      %1198 = vmatpush1.msra.mxu0 %v1184
      %1199 = vmatprep.subr.mxu0 0.0
      %1200 = vmatpush1.msra.mxu0 %v1185
      %1201 = vmatprep.subr.mxu0 0.0
      %1202 = vmatpush1.msra.mxu0 %v1186
      %1203 = vmatprep.subr.mxu0 0.0
      %1204 = vmatpush1.msra.mxu0 %v1187
      %1205 = vmatprep.subr.mxu0 0.0
      %1206 = vmatpush1.msra.mxu0 %v1188
      %1207 = vmatprep.subr.mxu0 0.0
      %1208 = vmatpush1.msra.mxu0 %v1189
      %1209 = vmatprep.subr.mxu0 0.0
      %1210 = vmatpush1.msra.mxu0 0.0
      %1211 = vmatprep.subr.mxu0 0.0
      %1212 = vmatpush1.msra.mxu0 0.0
      %1213 = vmatprep.subr.mxu0 0.0
      %1214 = vmatpush1.msra.mxu0 0.0
      %1215 = vmatprep.subr.mxu0 0.0
      %1216 = vmatpush1.msra.mxu0 0.0
      %1217 = vmatprep.subr.mxu0 0.0
      %1218 = vmatpush1.msra.mxu0 0.0
      %1219 = vmatprep.subr.mxu0 0.0
      %1220 = vmatpush1.msra.mxu0 0.0
      %1221 = vmatprep.subr.mxu0 0.0
      %1222 = vmatpush1.msra.mxu0 0.0
      %1223 = vmatprep.subr.mxu0 0.0
      %1224 = vmatpush1.msra.mxu0 0.0
      %1225 = vmatprep.subr.mxu0 0.0
      %1226 = vmatpush1.msra.mxu0 0.0
      %1227 = vmatprep.subr.mxu0 0.0
      %1228 = vmatpush1.msra.mxu0 0.0
      %1229 = vmatprep.subr.mxu0 0.0
      %1230 = vmatpush1.msra.mxu0 0.0
      %1231 = vmatprep.subr.mxu0 0.0
      %1232 = vmatpush1.msra.mxu0 0.0
      %1233 = vmatprep.subr.mxu0 0.0
      %1234 = vmatpush1.msra.mxu0 0.0
      %1235 = vmatprep.subr.mxu0 0.0
      %1236 = vmatpush1.msra.mxu0 0.0
      %1237 = vmatprep.subr.mxu0 0.0
      %1238 = vmatpush1.msra.mxu0 0.0
      %1239 = vmatprep.subr.mxu0 0.0
      %1240 = vmatpush1.msra.mxu0 0.0
      %1241 = vmatprep.subr.mxu0 0.0
      %1242 = vmatpush1.msra.mxu0 0.0
      %1243 = vmatprep.subr.mxu0 0.0
      %1244 = vmatpush1.msra.mxu0 0.0
      %1245 = vmatprep.subr.mxu0 0.0
      %1246 = vmatpush1.msra.mxu0 0.0
      %1247 = vmatprep.subr.mxu0 0.0
      %1248 = vmatpush1.msra.mxu0 0.0
      %1249 = vmatprep.subr.mxu0 0.0
      %1250 = vmatpush1.msra.mxu0 0.0
      %1251 = vmatprep.subr.mxu0 0.0
      %1252 = vmatpush1.msra.mxu0 0.0
      %1253 = vmatprep.subr.mxu0 0.0
      %1254 = vmatpush1.msra.mxu0 0.0
      %1255 = vmatprep.subr.mxu0 0.0
      %1256 = vmatpush1.msra.mxu0 0.0
      %1257 = vmatprep.mubr.f32.mxu0 0.0
      %1258 = vmatmul.mubr.f32.gmra.mrb[0].mxu0 %v1191
      %v1259 = vpop.f32.mrb[0].mxu0
      %v1260 = vadd.f32 0.0, %v1259
      %v1261 = vpop.f32.mrb[0].mxu0
      %1262 = vdwg.mxu0
      %v1263 = vadd.f32 %v1180, %v1260
      %s1264 = scalar_lea.vmem %s5, 384
      %v1265 = vld [vmem:[%s1264] sm:$0xff]
      %v1266 = vld [vmem:[%s1264 + $0x8] sm:$0xff]
      %v1267 = vld [vmem:[%s1264 + $0x10] sm:$0xff]
      %v1268 = vld [vmem:[%s1264 + $0x18] sm:$0xff]
      %v1269 = vld [vmem:[%s1264 + $0x20] sm:$0xff]
      %v1270 = vld [vmem:[%s1264 + $0x28] sm:$0xff]
      %v1271 = vld [vmem:[%s1264 + $0x30] sm:$0xff]
      %v1272 = vld [vmem:[%s1264 + $0x38] sm:$0xff]
      %v1273 = vrot.slane %v765, 6
      %v1274 = vsel %vm644, %v1273, 0
      %1276 = vmatprep.subr.mxu0 0.0
      %1277 = vmatpush1.msra.mxu0 %v1265
      %1278 = vmatprep.subr.mxu0 0.0
      %1279 = vmatpush1.msra.mxu0 %v1266
      %1280 = vmatprep.subr.mxu0 0.0
      %1281 = vmatpush1.msra.mxu0 %v1267
      %1282 = vmatprep.subr.mxu0 0.0
      %1283 = vmatpush1.msra.mxu0 %v1268
      %1284 = vmatprep.subr.mxu0 0.0
      %1285 = vmatpush1.msra.mxu0 %v1269
      %1286 = vmatprep.subr.mxu0 0.0
      %1287 = vmatpush1.msra.mxu0 %v1270
      %1288 = vmatprep.subr.mxu0 0.0
      %1289 = vmatpush1.msra.mxu0 %v1271
      %1290 = vmatprep.subr.mxu0 0.0
      %1291 = vmatpush1.msra.mxu0 %v1272
      %1292 = vmatprep.subr.mxu0 0.0
      %1293 = vmatpush1.msra.mxu0 0.0
      %1294 = vmatprep.subr.mxu0 0.0
      %1295 = vmatpush1.msra.mxu0 0.0
      %1296 = vmatprep.subr.mxu0 0.0
      %1297 = vmatpush1.msra.mxu0 0.0
      %1298 = vmatprep.subr.mxu0 0.0
      %1299 = vmatpush1.msra.mxu0 0.0
      %1300 = vmatprep.subr.mxu0 0.0
      %1301 = vmatpush1.msra.mxu0 0.0
      %1302 = vmatprep.subr.mxu0 0.0
      %1303 = vmatpush1.msra.mxu0 0.0
      %1304 = vmatprep.subr.mxu0 0.0
      %1305 = vmatpush1.msra.mxu0 0.0
      %1306 = vmatprep.subr.mxu0 0.0
      %1307 = vmatpush1.msra.mxu0 0.0
      %1308 = vmatprep.subr.mxu0 0.0
      %1309 = vmatpush1.msra.mxu0 0.0
      %1310 = vmatprep.subr.mxu0 0.0
      %1311 = vmatpush1.msra.mxu0 0.0
      %1312 = vmatprep.subr.mxu0 0.0
      %1313 = vmatpush1.msra.mxu0 0.0
      %1314 = vmatprep.subr.mxu0 0.0
      %1315 = vmatpush1.msra.mxu0 0.0
      %1316 = vmatprep.subr.mxu0 0.0
      %1317 = vmatpush1.msra.mxu0 0.0
      %1318 = vmatprep.subr.mxu0 0.0
      %1319 = vmatpush1.msra.mxu0 0.0
      %1320 = vmatprep.subr.mxu0 0.0
      %1321 = vmatpush1.msra.mxu0 0.0
      %1322 = vmatprep.subr.mxu0 0.0
      %1323 = vmatpush1.msra.mxu0 0.0
      %1324 = vmatprep.subr.mxu0 0.0
      %1325 = vmatpush1.msra.mxu0 0.0
      %1326 = vmatprep.subr.mxu0 0.0
      %1327 = vmatpush1.msra.mxu0 0.0
      %1328 = vmatprep.subr.mxu0 0.0
      %1329 = vmatpush1.msra.mxu0 0.0
      %1330 = vmatprep.subr.mxu0 0.0
      %1331 = vmatpush1.msra.mxu0 0.0
      %1332 = vmatprep.subr.mxu0 0.0
      %1333 = vmatpush1.msra.mxu0 0.0
      %1334 = vmatprep.subr.mxu0 0.0
      %1335 = vmatpush1.msra.mxu0 0.0
      %1336 = vmatprep.subr.mxu0 0.0
      %1337 = vmatpush1.msra.mxu0 0.0
      %1338 = vmatprep.subr.mxu0 0.0
      %1339 = vmatpush1.msra.mxu0 0.0
      %1340 = vmatprep.mubr.f32.mxu0 0.0
      %1341 = vmatmul.mubr.f32.gmra.mrb[0].mxu0 %v1274
      %v1342 = vpop.f32.mrb[0].mxu0
      %v1343 = vadd.f32 0.0, %v1342
      %v1344 = vpop.f32.mrb[0].mxu0
      %1345 = vdwg.mxu0
      %v1346 = vadd.f32 %v1263, %v1343
      %s1347 = scalar_lea.vmem %s5, 448
      %v1348 = vld [vmem:[%s1347] sm:$0xff]
      %v1349 = vld [vmem:[%s1347 + $0x8] sm:$0xff]
      %v1350 = vld [vmem:[%s1347 + $0x10] sm:$0xff]
      %v1351 = vld [vmem:[%s1347 + $0x18] sm:$0xff]
      %v1352 = vld [vmem:[%s1347 + $0x20] sm:$0xff]
      %v1353 = vld [vmem:[%s1347 + $0x28] sm:$0xff]
      %v1354 = vld [vmem:[%s1347 + $0x30] sm:$0xff]
      %v1355 = vld [vmem:[%s1347 + $0x38] sm:$0xff]
      %v1356 = vrot.slane %v765, 7
      %v1357 = vsel %vm644, %v1356, 0
      %1359 = vmatprep.subr.mxu0 0.0
      %1360 = vmatpush1.msra.mxu0 %v1348
      %1361 = vmatprep.subr.mxu0 0.0
      %1362 = vmatpush1.msra.mxu0 %v1349
      %1363 = vmatprep.subr.mxu0 0.0
      %1364 = vmatpush1.msra.mxu0 %v1350
      %1365 = vmatprep.subr.mxu0 0.0
      %1366 = vmatpush1.msra.mxu0 %v1351
      %1367 = vmatprep.subr.mxu0 0.0
      %1368 = vmatpush1.msra.mxu0 %v1352
      %1369 = vmatprep.subr.mxu0 0.0
      %1370 = vmatpush1.msra.mxu0 %v1353
      %1371 = vmatprep.subr.mxu0 0.0
      %1372 = vmatpush1.msra.mxu0 %v1354
      %1373 = vmatprep.subr.mxu0 0.0
      %1374 = vmatpush1.msra.mxu0 %v1355
      %1375 = vmatprep.subr.mxu0 0.0
      %1376 = vmatpush1.msra.mxu0 0.0
      %1377 = vmatprep.subr.mxu0 0.0
      %1378 = vmatpush1.msra.mxu0 0.0
      %1379 = vmatprep.subr.mxu0 0.0
      %1380 = vmatpush1.msra.mxu0 0.0
      %1381 = vmatprep.subr.mxu0 0.0
      %1382 = vmatpush1.msra.mxu0 0.0
      %1383 = vmatprep.subr.mxu0 0.0
      %1384 = vmatpush1.msra.mxu0 0.0
      %1385 = vmatprep.subr.mxu0 0.0
      %1386 = vmatpush1.msra.mxu0 0.0
      %1387 = vmatprep.subr.mxu0 0.0
      %1388 = vmatpush1.msra.mxu0 0.0
      %1389 = vmatprep.subr.mxu0 0.0
      %1390 = vmatpush1.msra.mxu0 0.0
      %1391 = vmatprep.subr.mxu0 0.0
      %1392 = vmatpush1.msra.mxu0 0.0
      %1393 = vmatprep.subr.mxu0 0.0
      %1394 = vmatpush1.msra.mxu0 0.0
      %1395 = vmatprep.subr.mxu0 0.0
      %1396 = vmatpush1.msra.mxu0 0.0
      %1397 = vmatprep.subr.mxu0 0.0
      %1398 = vmatpush1.msra.mxu0 0.0
      %1399 = vmatprep.subr.mxu0 0.0
      %1400 = vmatpush1.msra.mxu0 0.0
      %1401 = vmatprep.subr.mxu0 0.0
      %1402 = vmatpush1.msra.mxu0 0.0
      %1403 = vmatprep.subr.mxu0 0.0
      %1404 = vmatpush1.msra.mxu0 0.0
      %1405 = vmatprep.subr.mxu0 0.0
      %1406 = vmatpush1.msra.mxu0 0.0
      %1407 = vmatprep.subr.mxu0 0.0
      %1408 = vmatpush1.msra.mxu0 0.0
      %1409 = vmatprep.subr.mxu0 0.0
      %1410 = vmatpush1.msra.mxu0 0.0
      %1411 = vmatprep.subr.mxu0 0.0
      %1412 = vmatpush1.msra.mxu0 0.0
      %1413 = vmatprep.subr.mxu0 0.0
      %1414 = vmatpush1.msra.mxu0 0.0
      %1415 = vmatprep.subr.mxu0 0.0
      %1416 = vmatpush1.msra.mxu0 0.0
      %1417 = vmatprep.subr.mxu0 0.0
      %1418 = vmatpush1.msra.mxu0 0.0
      %1419 = vmatprep.subr.mxu0 0.0
      %1420 = vmatpush1.msra.mxu0 0.0
      %1421 = vmatprep.subr.mxu0 0.0
      %1422 = vmatpush1.msra.mxu0 0.0
      %1423 = vmatprep.mubr.f32.mxu0 0.0
      %1424 = vmatmul.mubr.f32.gmra.mrb[0].mxu0 %v1357
      %v1425 = vpop.f32.mrb[0].mxu0
      %v1426 = vadd.f32 0.0, %v1425
      %v1427 = vpop.f32.mrb[0].mxu0
      %1428 = vdwg.mxu0
      %v1429 = vadd.f32 %v1346, %v1426
      %v1430 = vld [vmem:[%s7] sm:$0xff]
      %vm1431 = vcmask 64512
      %v1433 = vsel %vm1431, %v1429, 0
      %1435 = vmatprep.subr.mxu0 0.0
      %1436 = vmatpush1.msra.mxu0 %v1430
      %1437 = vmatprep.subr.mxu0 0.0
      %1438 = vmatpush1.msra.mxu0 0.0
      %1439 = vmatprep.subr.mxu0 0.0
      %1440 = vmatpush1.msra.mxu0 0.0
      %1441 = vmatprep.subr.mxu0 0.0
      %1442 = vmatpush1.msra.mxu0 0.0
      %1443 = vmatprep.subr.mxu0 0.0
      %1444 = vmatpush1.msra.mxu0 0.0
      %1445 = vmatprep.subr.mxu0 0.0
      %1446 = vmatpush1.msra.mxu0 0.0
      %1447 = vmatprep.subr.mxu0 0.0
      %1448 = vmatpush1.msra.mxu0 0.0
      %1449 = vmatprep.subr.mxu0 0.0
      %1450 = vmatpush1.msra.mxu0 0.0
      %1451 = vmatprep.subr.mxu0 0.0
      %1452 = vmatpush1.msra.mxu0 0.0
      %1453 = vmatprep.subr.mxu0 0.0
      %1454 = vmatpush1.msra.mxu0 0.0
      %1455 = vmatprep.subr.mxu0 0.0
      %1456 = vmatpush1.msra.mxu0 0.0
      %1457 = vmatprep.subr.mxu0 0.0
      %1458 = vmatpush1.msra.mxu0 0.0
      %1459 = vmatprep.subr.mxu0 0.0
      %1460 = vmatpush1.msra.mxu0 0.0
      %1461 = vmatprep.subr.mxu0 0.0
      %1462 = vmatpush1.msra.mxu0 0.0
      %1463 = vmatprep.subr.mxu0 0.0
      %1464 = vmatpush1.msra.mxu0 0.0
      %1465 = vmatprep.subr.mxu0 0.0
      %1466 = vmatpush1.msra.mxu0 0.0
      %1467 = vmatprep.subr.mxu0 0.0
      %1468 = vmatpush1.msra.mxu0 0.0
      %1469 = vmatprep.subr.mxu0 0.0
      %1470 = vmatpush1.msra.mxu0 0.0
      %1471 = vmatprep.subr.mxu0 0.0
      %1472 = vmatpush1.msra.mxu0 0.0
      %1473 = vmatprep.subr.mxu0 0.0
      %1474 = vmatpush1.msra.mxu0 0.0
      %1475 = vmatprep.subr.mxu0 0.0
      %1476 = vmatpush1.msra.mxu0 0.0
      %1477 = vmatprep.subr.mxu0 0.0
      %1478 = vmatpush1.msra.mxu0 0.0
      %1479 = vmatprep.subr.mxu0 0.0
      %1480 = vmatpush1.msra.mxu0 0.0
      %1481 = vmatprep.subr.mxu0 0.0
      %1482 = vmatpush1.msra.mxu0 0.0
      %1483 = vmatprep.subr.mxu0 0.0
      %1484 = vmatpush1.msra.mxu0 0.0
      %1485 = vmatprep.subr.mxu0 0.0
      %1486 = vmatpush1.msra.mxu0 0.0
      %1487 = vmatprep.subr.mxu0 0.0
      %1488 = vmatpush1.msra.mxu0 0.0
      %1489 = vmatprep.subr.mxu0 0.0
      %1490 = vmatpush1.msra.mxu0 0.0
      %1491 = vmatprep.subr.mxu0 0.0
      %1492 = vmatpush1.msra.mxu0 0.0
      %1493 = vmatprep.subr.mxu0 0.0
      %1494 = vmatpush1.msra.mxu0 0.0
      %1495 = vmatprep.subr.mxu0 0.0
      %1496 = vmatpush1.msra.mxu0 0.0
      %1497 = vmatprep.subr.mxu0 0.0
      %1498 = vmatpush1.msra.mxu0 0.0
      %1499 = vmatprep.mubr.f32.mxu0 0.0
      %1500 = vmatmul.mubr.f32.gmra.mrb[0].mxu0 %v1433
      %v1501 = vpop.f32.mrb[0].mxu0
      %v1502 = vadd.f32 0.0, %v1501
      %v1503 = vpop.f32.mrb[0].mxu0
      %1504 = vdwg.mxu0
      %s1505 = scalar_lea.vmem %s7, 8
      %v1506 = vld [vmem:[%s1505] sm:$0xff]
      %1507 = vmatprep.subr.mxu0 0.0
      %1508 = vmatpush1.msra.mxu0 %v1506
      %1509 = vmatprep.subr.mxu0 0.0
      %1510 = vmatpush1.msra.mxu0 0.0
      %1511 = vmatprep.subr.mxu0 0.0
      %1512 = vmatpush1.msra.mxu0 0.0
      %1513 = vmatprep.subr.mxu0 0.0
      %1514 = vmatpush1.msra.mxu0 0.0
      %1515 = vmatprep.subr.mxu0 0.0
      %1516 = vmatpush1.msra.mxu0 0.0
      %1517 = vmatprep.subr.mxu0 0.0
      %1518 = vmatpush1.msra.mxu0 0.0
      %1519 = vmatprep.subr.mxu0 0.0
      %1520 = vmatpush1.msra.mxu0 0.0
      %1521 = vmatprep.subr.mxu0 0.0
      %1522 = vmatpush1.msra.mxu0 0.0
      %1523 = vmatprep.subr.mxu0 0.0
      %1524 = vmatpush1.msra.mxu0 0.0
      %1525 = vmatprep.subr.mxu0 0.0
      %1526 = vmatpush1.msra.mxu0 0.0
      %1527 = vmatprep.subr.mxu0 0.0
      %1528 = vmatpush1.msra.mxu0 0.0
      %1529 = vmatprep.subr.mxu0 0.0
      %1530 = vmatpush1.msra.mxu0 0.0
      %1531 = vmatprep.subr.mxu0 0.0
      %1532 = vmatpush1.msra.mxu0 0.0
      %1533 = vmatprep.subr.mxu0 0.0
      %1534 = vmatpush1.msra.mxu0 0.0
      %1535 = vmatprep.subr.mxu0 0.0
      %1536 = vmatpush1.msra.mxu0 0.0
      %1537 = vmatprep.subr.mxu0 0.0
      %1538 = vmatpush1.msra.mxu0 0.0
      %1539 = vmatprep.subr.mxu0 0.0
      %1540 = vmatpush1.msra.mxu0 0.0
      %1541 = vmatprep.subr.mxu0 0.0
      %1542 = vmatpush1.msra.mxu0 0.0
      %1543 = vmatprep.subr.mxu0 0.0
      %1544 = vmatpush1.msra.mxu0 0.0
      %1545 = vmatprep.subr.mxu0 0.0
      %1546 = vmatpush1.msra.mxu0 0.0
      %1547 = vmatprep.subr.mxu0 0.0
      %1548 = vmatpush1.msra.mxu0 0.0
      %1549 = vmatprep.subr.mxu0 0.0
      %1550 = vmatpush1.msra.mxu0 0.0
      %1551 = vmatprep.subr.mxu0 0.0
      %1552 = vmatpush1.msra.mxu0 0.0
      %1553 = vmatprep.subr.mxu0 0.0
      %1554 = vmatpush1.msra.mxu0 0.0
      %1555 = vmatprep.subr.mxu0 0.0
      %1556 = vmatpush1.msra.mxu0 0.0
      %1557 = vmatprep.subr.mxu0 0.0
      %1558 = vmatpush1.msra.mxu0 0.0
      %1559 = vmatprep.subr.mxu0 0.0
      %1560 = vmatpush1.msra.mxu0 0.0
      %1561 = vmatprep.subr.mxu0 0.0
      %1562 = vmatpush1.msra.mxu0 0.0
      %1563 = vmatprep.subr.mxu0 0.0
      %1564 = vmatpush1.msra.mxu0 0.0
      %1565 = vmatprep.subr.mxu0 0.0
      %1566 = vmatpush1.msra.mxu0 0.0
      %1567 = vmatprep.subr.mxu0 0.0
      %1568 = vmatpush1.msra.mxu0 0.0
      %1569 = vmatprep.subr.mxu0 0.0
      %1570 = vmatpush1.msra.mxu0 0.0
      %1571 = vmatprep.mubr.f32.mxu0 0.0
      %1572 = vmatmul.mubr.f32.gmra.mrb[0].mxu0 %v1433
      %v1573 = vpop.f32.mrb[0].mxu0
      %v1574 = vadd.f32 0.0, %v1573
      %v1575 = vpop.f32.mrb[0].mxu0
      %1576 = vdwg.mxu0
      %s1577 = scalar_lea.vmem %s7, 16
      %v1578 = vld [vmem:[%s1577] sm:$0xff]
      %1579 = vmatprep.subr.mxu0 0.0
      %1580 = vmatpush1.msra.mxu0 %v1578
      %1581 = vmatprep.subr.mxu0 0.0
      %1582 = vmatpush1.msra.mxu0 0.0
      %1583 = vmatprep.subr.mxu0 0.0
      %1584 = vmatpush1.msra.mxu0 0.0
      %1585 = vmatprep.subr.mxu0 0.0
      %1586 = vmatpush1.msra.mxu0 0.0
      %1587 = vmatprep.subr.mxu0 0.0
      %1588 = vmatpush1.msra.mxu0 0.0
      %1589 = vmatprep.subr.mxu0 0.0
      %1590 = vmatpush1.msra.mxu0 0.0
      %1591 = vmatprep.subr.mxu0 0.0
      %1592 = vmatpush1.msra.mxu0 0.0
      %1593 = vmatprep.subr.mxu0 0.0
      %1594 = vmatpush1.msra.mxu0 0.0
      %1595 = vmatprep.subr.mxu0 0.0
      %1596 = vmatpush1.msra.mxu0 0.0
      %1597 = vmatprep.subr.mxu0 0.0
      %1598 = vmatpush1.msra.mxu0 0.0
      %1599 = vmatprep.subr.mxu0 0.0
      %1600 = vmatpush1.msra.mxu0 0.0
      %1601 = vmatprep.subr.mxu0 0.0
      %1602 = vmatpush1.msra.mxu0 0.0
      %1603 = vmatprep.subr.mxu0 0.0
      %1604 = vmatpush1.msra.mxu0 0.0
      %1605 = vmatprep.subr.mxu0 0.0
      %1606 = vmatpush1.msra.mxu0 0.0
      %1607 = vmatprep.subr.mxu0 0.0
      %1608 = vmatpush1.msra.mxu0 0.0
      %1609 = vmatprep.subr.mxu0 0.0
      %1610 = vmatpush1.msra.mxu0 0.0
      %1611 = vmatprep.subr.mxu0 0.0
      %1612 = vmatpush1.msra.mxu0 0.0
      %1613 = vmatprep.subr.mxu0 0.0
      %1614 = vmatpush1.msra.mxu0 0.0
      %1615 = vmatprep.subr.mxu0 0.0
      %1616 = vmatpush1.msra.mxu0 0.0
      %1617 = vmatprep.subr.mxu0 0.0
      %1618 = vmatpush1.msra.mxu0 0.0
      %1619 = vmatprep.subr.mxu0 0.0
      %1620 = vmatpush1.msra.mxu0 0.0
      %1621 = vmatprep.subr.mxu0 0.0
      %1622 = vmatpush1.msra.mxu0 0.0
      %1623 = vmatprep.subr.mxu0 0.0
      %1624 = vmatpush1.msra.mxu0 0.0
      %1625 = vmatprep.subr.mxu0 0.0
      %1626 = vmatpush1.msra.mxu0 0.0
      %1627 = vmatprep.subr.mxu0 0.0
      %1628 = vmatpush1.msra.mxu0 0.0
      %1629 = vmatprep.subr.mxu0 0.0
      %1630 = vmatpush1.msra.mxu0 0.0
      %1631 = vmatprep.subr.mxu0 0.0
      %1632 = vmatpush1.msra.mxu0 0.0
      %1633 = vmatprep.subr.mxu0 0.0
      %1634 = vmatpush1.msra.mxu0 0.0
      %1635 = vmatprep.subr.mxu0 0.0
      %1636 = vmatpush1.msra.mxu0 0.0
      %1637 = vmatprep.subr.mxu0 0.0
      %1638 = vmatpush1.msra.mxu0 0.0
      %1639 = vmatprep.subr.mxu0 0.0
      %1640 = vmatpush1.msra.mxu0 0.0
      %1641 = vmatprep.subr.mxu0 0.0
      %1642 = vmatpush1.msra.mxu0 0.0
      %1643 = vmatprep.mubr.f32.mxu0 0.0
      %1644 = vmatmul.mubr.f32.gmra.mrb[0].mxu0 %v1433
      %v1645 = vpop.f32.mrb[0].mxu0
      %v1646 = vadd.f32 0.0, %v1645
      %v1647 = vpop.f32.mrb[0].mxu0
      %1648 = vdwg.mxu0
      %s1649 = scalar_lea.vmem %s7, 24
      %v1650 = vld [vmem:[%s1649] sm:$0xff]
      %1651 = vmatprep.subr.mxu0 0.0
      %1652 = vmatpush1.msra.mxu0 %v1650
      %1653 = vmatprep.subr.mxu0 0.0
      %1654 = vmatpush1.msra.mxu0 0.0
      %1655 = vmatprep.subr.mxu0 0.0
      %1656 = vmatpush1.msra.mxu0 0.0
      %1657 = vmatprep.subr.mxu0 0.0
      %1658 = vmatpush1.msra.mxu0 0.0
      %1659 = vmatprep.subr.mxu0 0.0
      %1660 = vmatpush1.msra.mxu0 0.0
      %1661 = vmatprep.subr.mxu0 0.0
      %1662 = vmatpush1.msra.mxu0 0.0
      %1663 = vmatprep.subr.mxu0 0.0
      %1664 = vmatpush1.msra.mxu0 0.0
      %1665 = vmatprep.subr.mxu0 0.0
      %1666 = vmatpush1.msra.mxu0 0.0
      %1667 = vmatprep.subr.mxu0 0.0
      %1668 = vmatpush1.msra.mxu0 0.0
      %1669 = vmatprep.subr.mxu0 0.0
      %1670 = vmatpush1.msra.mxu0 0.0
      %1671 = vmatprep.subr.mxu0 0.0
      %1672 = vmatpush1.msra.mxu0 0.0
      %1673 = vmatprep.subr.mxu0 0.0
      %1674 = vmatpush1.msra.mxu0 0.0
      %1675 = vmatprep.subr.mxu0 0.0
      %1676 = vmatpush1.msra.mxu0 0.0
      %1677 = vmatprep.subr.mxu0 0.0
      %1678 = vmatpush1.msra.mxu0 0.0
      %1679 = vmatprep.subr.mxu0 0.0
      %1680 = vmatpush1.msra.mxu0 0.0
      %1681 = vmatprep.subr.mxu0 0.0
      %1682 = vmatpush1.msra.mxu0 0.0
      %1683 = vmatprep.subr.mxu0 0.0
      %1684 = vmatpush1.msra.mxu0 0.0
      %1685 = vmatprep.subr.mxu0 0.0
      %1686 = vmatpush1.msra.mxu0 0.0
      %1687 = vmatprep.subr.mxu0 0.0
      %1688 = vmatpush1.msra.mxu0 0.0
      %1689 = vmatprep.subr.mxu0 0.0
      %1690 = vmatpush1.msra.mxu0 0.0
      %1691 = vmatprep.subr.mxu0 0.0
      %1692 = vmatpush1.msra.mxu0 0.0
      %1693 = vmatprep.subr.mxu0 0.0
      %1694 = vmatpush1.msra.mxu0 0.0
      %1695 = vmatprep.subr.mxu0 0.0
      %1696 = vmatpush1.msra.mxu0 0.0
      %1697 = vmatprep.subr.mxu0 0.0
      %1698 = vmatpush1.msra.mxu0 0.0
      %1699 = vmatprep.subr.mxu0 0.0
      %1700 = vmatpush1.msra.mxu0 0.0
      %1701 = vmatprep.subr.mxu0 0.0
      %1702 = vmatpush1.msra.mxu0 0.0
      %1703 = vmatprep.subr.mxu0 0.0
      %1704 = vmatpush1.msra.mxu0 0.0
      %1705 = vmatprep.subr.mxu0 0.0
      %1706 = vmatpush1.msra.mxu0 0.0
      %1707 = vmatprep.subr.mxu0 0.0
      %1708 = vmatpush1.msra.mxu0 0.0
      %1709 = vmatprep.subr.mxu0 0.0
      %1710 = vmatpush1.msra.mxu0 0.0
      %1711 = vmatprep.subr.mxu0 0.0
      %1712 = vmatpush1.msra.mxu0 0.0
      %1713 = vmatprep.subr.mxu0 0.0
      %1714 = vmatpush1.msra.mxu0 0.0
      %1715 = vmatprep.mubr.f32.mxu0 0.0
      %1716 = vmatmul.mubr.f32.gmra.mrb[0].mxu0 %v1433
      %v1717 = vpop.f32.mrb[0].mxu0
      %v1718 = vadd.f32 0.0, %v1717
      %v1719 = vpop.f32.mrb[0].mxu0
      %1720 = vdwg.mxu0
      %s1721 = scalar_lea.vmem %s7, 32
      %v1722 = vld [vmem:[%s1721] sm:$0xff]
      %1723 = vmatprep.subr.mxu0 0.0
      %1724 = vmatpush1.msra.mxu0 %v1722
      %1725 = vmatprep.subr.mxu0 0.0
      %1726 = vmatpush1.msra.mxu0 0.0
      %1727 = vmatprep.subr.mxu0 0.0
      %1728 = vmatpush1.msra.mxu0 0.0
      %1729 = vmatprep.subr.mxu0 0.0
      %1730 = vmatpush1.msra.mxu0 0.0
      %1731 = vmatprep.subr.mxu0 0.0
      %1732 = vmatpush1.msra.mxu0 0.0
      %1733 = vmatprep.subr.mxu0 0.0
      %1734 = vmatpush1.msra.mxu0 0.0
      %1735 = vmatprep.subr.mxu0 0.0
      %1736 = vmatpush1.msra.mxu0 0.0
      %1737 = vmatprep.subr.mxu0 0.0
      %1738 = vmatpush1.msra.mxu0 0.0
      %1739 = vmatprep.subr.mxu0 0.0
      %1740 = vmatpush1.msra.mxu0 0.0
      %1741 = vmatprep.subr.mxu0 0.0
      %1742 = vmatpush1.msra.mxu0 0.0
      %1743 = vmatprep.subr.mxu0 0.0
      %1744 = vmatpush1.msra.mxu0 0.0
      %1745 = vmatprep.subr.mxu0 0.0
      %1746 = vmatpush1.msra.mxu0 0.0
      %1747 = vmatprep.subr.mxu0 0.0
      %1748 = vmatpush1.msra.mxu0 0.0
      %1749 = vmatprep.subr.mxu0 0.0
      %1750 = vmatpush1.msra.mxu0 0.0
      %1751 = vmatprep.subr.mxu0 0.0
      %1752 = vmatpush1.msra.mxu0 0.0
      %1753 = vmatprep.subr.mxu0 0.0
      %1754 = vmatpush1.msra.mxu0 0.0
      %1755 = vmatprep.subr.mxu0 0.0
      %1756 = vmatpush1.msra.mxu0 0.0
      %1757 = vmatprep.subr.mxu0 0.0
      %1758 = vmatpush1.msra.mxu0 0.0
      %1759 = vmatprep.subr.mxu0 0.0
      %1760 = vmatpush1.msra.mxu0 0.0
      %1761 = vmatprep.subr.mxu0 0.0
      %1762 = vmatpush1.msra.mxu0 0.0
      %1763 = vmatprep.subr.mxu0 0.0
      %1764 = vmatpush1.msra.mxu0 0.0
      %1765 = vmatprep.subr.mxu0 0.0
      %1766 = vmatpush1.msra.mxu0 0.0
      %1767 = vmatprep.subr.mxu0 0.0
      %1768 = vmatpush1.msra.mxu0 0.0
      %1769 = vmatprep.subr.mxu0 0.0
      %1770 = vmatpush1.msra.mxu0 0.0
      %1771 = vmatprep.subr.mxu0 0.0
      %1772 = vmatpush1.msra.mxu0 0.0
      %1773 = vmatprep.subr.mxu0 0.0
      %1774 = vmatpush1.msra.mxu0 0.0
      %1775 = vmatprep.subr.mxu0 0.0
      %1776 = vmatpush1.msra.mxu0 0.0
      %1777 = vmatprep.subr.mxu0 0.0
      %1778 = vmatpush1.msra.mxu0 0.0
      %1779 = vmatprep.subr.mxu0 0.0
      %1780 = vmatpush1.msra.mxu0 0.0
      %1781 = vmatprep.subr.mxu0 0.0
      %1782 = vmatpush1.msra.mxu0 0.0
      %1783 = vmatprep.subr.mxu0 0.0
      %1784 = vmatpush1.msra.mxu0 0.0
      %1785 = vmatprep.subr.mxu0 0.0
      %1786 = vmatpush1.msra.mxu0 0.0
      %1787 = vmatprep.mubr.f32.mxu0 0.0
      %1788 = vmatmul.mubr.f32.gmra.mrb[0].mxu0 %v1433
      %v1789 = vpop.f32.mrb[0].mxu0
      %v1790 = vadd.f32 0.0, %v1789
      %v1791 = vpop.f32.mrb[0].mxu0
      %1792 = vdwg.mxu0
      %s1793 = scalar_lea.vmem %s7, 40
      %v1794 = vld [vmem:[%s1793] sm:$0xff]
      %1795 = vmatprep.subr.mxu0 0.0
      %1796 = vmatpush1.msra.mxu0 %v1794
      %1797 = vmatprep.subr.mxu0 0.0
      %1798 = vmatpush1.msra.mxu0 0.0
      %1799 = vmatprep.subr.mxu0 0.0
      %1800 = vmatpush1.msra.mxu0 0.0
      %1801 = vmatprep.subr.mxu0 0.0
      %1802 = vmatpush1.msra.mxu0 0.0
      %1803 = vmatprep.subr.mxu0 0.0
      %1804 = vmatpush1.msra.mxu0 0.0
      %1805 = vmatprep.subr.mxu0 0.0
      %1806 = vmatpush1.msra.mxu0 0.0
      %1807 = vmatprep.subr.mxu0 0.0
      %1808 = vmatpush1.msra.mxu0 0.0
      %1809 = vmatprep.subr.mxu0 0.0
      %1810 = vmatpush1.msra.mxu0 0.0
      %1811 = vmatprep.subr.mxu0 0.0
      %1812 = vmatpush1.msra.mxu0 0.0
      %1813 = vmatprep.subr.mxu0 0.0
      %1814 = vmatpush1.msra.mxu0 0.0
      %1815 = vmatprep.subr.mxu0 0.0
      %1816 = vmatpush1.msra.mxu0 0.0
      %1817 = vmatprep.subr.mxu0 0.0
      %1818 = vmatpush1.msra.mxu0 0.0
      %1819 = vmatprep.subr.mxu0 0.0
      %1820 = vmatpush1.msra.mxu0 0.0
      %1821 = vmatprep.subr.mxu0 0.0
      %1822 = vmatpush1.msra.mxu0 0.0
      %1823 = vmatprep.subr.mxu0 0.0
      %1824 = vmatpush1.msra.mxu0 0.0
      %1825 = vmatprep.subr.mxu0 0.0
      %1826 = vmatpush1.msra.mxu0 0.0
      %1827 = vmatprep.subr.mxu0 0.0
      %1828 = vmatpush1.msra.mxu0 0.0
      %1829 = vmatprep.subr.mxu0 0.0
      %1830 = vmatpush1.msra.mxu0 0.0
      %1831 = vmatprep.subr.mxu0 0.0
      %1832 = vmatpush1.msra.mxu0 0.0
      %1833 = vmatprep.subr.mxu0 0.0
      %1834 = vmatpush1.msra.mxu0 0.0
      %1835 = vmatprep.subr.mxu0 0.0
      %1836 = vmatpush1.msra.mxu0 0.0
      %1837 = vmatprep.subr.mxu0 0.0
      %1838 = vmatpush1.msra.mxu0 0.0
      %1839 = vmatprep.subr.mxu0 0.0
      %1840 = vmatpush1.msra.mxu0 0.0
      %1841 = vmatprep.subr.mxu0 0.0
      %1842 = vmatpush1.msra.mxu0 0.0
      %1843 = vmatprep.subr.mxu0 0.0
      %1844 = vmatpush1.msra.mxu0 0.0
      %1845 = vmatprep.subr.mxu0 0.0
      %1846 = vmatpush1.msra.mxu0 0.0
      %1847 = vmatprep.subr.mxu0 0.0
      %1848 = vmatpush1.msra.mxu0 0.0
      %1849 = vmatprep.subr.mxu0 0.0
      %1850 = vmatpush1.msra.mxu0 0.0
      %1851 = vmatprep.subr.mxu0 0.0
      %1852 = vmatpush1.msra.mxu0 0.0
      %1853 = vmatprep.subr.mxu0 0.0
      %1854 = vmatpush1.msra.mxu0 0.0
      %1855 = vmatprep.subr.mxu0 0.0
      %1856 = vmatpush1.msra.mxu0 0.0
      %1857 = vmatprep.subr.mxu0 0.0
      %1858 = vmatpush1.msra.mxu0 0.0
      %1859 = vmatprep.mubr.f32.mxu0 0.0
      %1860 = vmatmul.mubr.f32.gmra.mrb[0].mxu0 %v1433
      %v1861 = vpop.f32.mrb[0].mxu0
      %v1862 = vadd.f32 0.0, %v1861
      %v1863 = vpop.f32.mrb[0].mxu0
      %1864 = vdwg.mxu0
      %s1865 = scalar_lea.vmem %s7, 48
      %v1866 = vld [vmem:[%s1865] sm:$0xff]
      %1867 = vmatprep.subr.mxu0 0.0
      %1868 = vmatpush1.msra.mxu0 %v1866
      %1869 = vmatprep.subr.mxu0 0.0
      %1870 = vmatpush1.msra.mxu0 0.0
      %1871 = vmatprep.subr.mxu0 0.0
      %1872 = vmatpush1.msra.mxu0 0.0
      %1873 = vmatprep.subr.mxu0 0.0
      %1874 = vmatpush1.msra.mxu0 0.0
      %1875 = vmatprep.subr.mxu0 0.0
      %1876 = vmatpush1.msra.mxu0 0.0
      %1877 = vmatprep.subr.mxu0 0.0
      %1878 = vmatpush1.msra.mxu0 0.0
      %1879 = vmatprep.subr.mxu0 0.0
      %1880 = vmatpush1.msra.mxu0 0.0
      %1881 = vmatprep.subr.mxu0 0.0
      %1882 = vmatpush1.msra.mxu0 0.0
      %1883 = vmatprep.subr.mxu0 0.0
      %1884 = vmatpush1.msra.mxu0 0.0
      %1885 = vmatprep.subr.mxu0 0.0
      %1886 = vmatpush1.msra.mxu0 0.0
      %1887 = vmatprep.subr.mxu0 0.0
      %1888 = vmatpush1.msra.mxu0 0.0
      %1889 = vmatprep.subr.mxu0 0.0
      %1890 = vmatpush1.msra.mxu0 0.0
      %1891 = vmatprep.subr.mxu0 0.0
      %1892 = vmatpush1.msra.mxu0 0.0
      %1893 = vmatprep.subr.mxu0 0.0
      %1894 = vmatpush1.msra.mxu0 0.0
      %1895 = vmatprep.subr.mxu0 0.0
      %1896 = vmatpush1.msra.mxu0 0.0
      %1897 = vmatprep.subr.mxu0 0.0
      %1898 = vmatpush1.msra.mxu0 0.0
      %1899 = vmatprep.subr.mxu0 0.0
      %1900 = vmatpush1.msra.mxu0 0.0
      %1901 = vmatprep.subr.mxu0 0.0
      %1902 = vmatpush1.msra.mxu0 0.0
      %1903 = vmatprep.subr.mxu0 0.0
      %1904 = vmatpush1.msra.mxu0 0.0
      %1905 = vmatprep.subr.mxu0 0.0
      %1906 = vmatpush1.msra.mxu0 0.0
      %1907 = vmatprep.subr.mxu0 0.0
      %1908 = vmatpush1.msra.mxu0 0.0
      %1909 = vmatprep.subr.mxu0 0.0
      %1910 = vmatpush1.msra.mxu0 0.0
      %1911 = vmatprep.subr.mxu0 0.0
      %1912 = vmatpush1.msra.mxu0 0.0
      %1913 = vmatprep.subr.mxu0 0.0
      %1914 = vmatpush1.msra.mxu0 0.0
      %1915 = vmatprep.subr.mxu0 0.0
      %1916 = vmatpush1.msra.mxu0 0.0
      %1917 = vmatprep.subr.mxu0 0.0
      %1918 = vmatpush1.msra.mxu0 0.0
      %1919 = vmatprep.subr.mxu0 0.0
      %1920 = vmatpush1.msra.mxu0 0.0
      %1921 = vmatprep.subr.mxu0 0.0
      %1922 = vmatpush1.msra.mxu0 0.0
      %1923 = vmatprep.subr.mxu0 0.0
      %1924 = vmatpush1.msra.mxu0 0.0
      %1925 = vmatprep.subr.mxu0 0.0
      %1926 = vmatpush1.msra.mxu0 0.0
      %1927 = vmatprep.subr.mxu0 0.0
      %1928 = vmatpush1.msra.mxu0 0.0
      %1929 = vmatprep.subr.mxu0 0.0
      %1930 = vmatpush1.msra.mxu0 0.0
      %1931 = vmatprep.mubr.f32.mxu0 0.0
      %1932 = vmatmul.mubr.f32.gmra.mrb[0].mxu0 %v1433
      %v1933 = vpop.f32.mrb[0].mxu0
      %v1934 = vadd.f32 0.0, %v1933
      %v1935 = vpop.f32.mrb[0].mxu0
      %1936 = vdwg.mxu0
      %s1937 = scalar_lea.vmem %s7, 56
      %v1938 = vld [vmem:[%s1937] sm:$0xff]
      %1939 = vmatprep.subr.mxu0 0.0
      %1940 = vmatpush1.msra.mxu0 %v1938
      %1941 = vmatprep.subr.mxu0 0.0
      %1942 = vmatpush1.msra.mxu0 0.0
      %1943 = vmatprep.subr.mxu0 0.0
      %1944 = vmatpush1.msra.mxu0 0.0
      %1945 = vmatprep.subr.mxu0 0.0
      %1946 = vmatpush1.msra.mxu0 0.0
      %1947 = vmatprep.subr.mxu0 0.0
      %1948 = vmatpush1.msra.mxu0 0.0
      %1949 = vmatprep.subr.mxu0 0.0
      %1950 = vmatpush1.msra.mxu0 0.0
      %1951 = vmatprep.subr.mxu0 0.0
      %1952 = vmatpush1.msra.mxu0 0.0
      %1953 = vmatprep.subr.mxu0 0.0
      %1954 = vmatpush1.msra.mxu0 0.0
      %1955 = vmatprep.subr.mxu0 0.0
      %1956 = vmatpush1.msra.mxu0 0.0
      %1957 = vmatprep.subr.mxu0 0.0
      %1958 = vmatpush1.msra.mxu0 0.0
      %1959 = vmatprep.subr.mxu0 0.0
      %1960 = vmatpush1.msra.mxu0 0.0
      %1961 = vmatprep.subr.mxu0 0.0
      %1962 = vmatpush1.msra.mxu0 0.0
      %1963 = vmatprep.subr.mxu0 0.0
      %1964 = vmatpush1.msra.mxu0 0.0
      %1965 = vmatprep.subr.mxu0 0.0
      %1966 = vmatpush1.msra.mxu0 0.0
      %1967 = vmatprep.subr.mxu0 0.0
      %1968 = vmatpush1.msra.mxu0 0.0
      %1969 = vmatprep.subr.mxu0 0.0
      %1970 = vmatpush1.msra.mxu0 0.0
      %1971 = vmatprep.subr.mxu0 0.0
      %1972 = vmatpush1.msra.mxu0 0.0
      %1973 = vmatprep.subr.mxu0 0.0
      %1974 = vmatpush1.msra.mxu0 0.0
      %1975 = vmatprep.subr.mxu0 0.0
      %1976 = vmatpush1.msra.mxu0 0.0
      %1977 = vmatprep.subr.mxu0 0.0
      %1978 = vmatpush1.msra.mxu0 0.0
      %1979 = vmatprep.subr.mxu0 0.0
      %1980 = vmatpush1.msra.mxu0 0.0
      %1981 = vmatprep.subr.mxu0 0.0
      %1982 = vmatpush1.msra.mxu0 0.0
      %1983 = vmatprep.subr.mxu0 0.0
      %1984 = vmatpush1.msra.mxu0 0.0
      %1985 = vmatprep.subr.mxu0 0.0
      %1986 = vmatpush1.msra.mxu0 0.0
      %1987 = vmatprep.subr.mxu0 0.0
      %1988 = vmatpush1.msra.mxu0 0.0
      %1989 = vmatprep.subr.mxu0 0.0
      %1990 = vmatpush1.msra.mxu0 0.0
      %1991 = vmatprep.subr.mxu0 0.0
      %1992 = vmatpush1.msra.mxu0 0.0
      %1993 = vmatprep.subr.mxu0 0.0
      %1994 = vmatpush1.msra.mxu0 0.0
      %1995 = vmatprep.subr.mxu0 0.0
      %1996 = vmatpush1.msra.mxu0 0.0
      %1997 = vmatprep.subr.mxu0 0.0
      %1998 = vmatpush1.msra.mxu0 0.0
      %1999 = vmatprep.subr.mxu0 0.0
      %2000 = vmatpush1.msra.mxu0 0.0
      %2001 = vmatprep.subr.mxu0 0.0
      %2002 = vmatpush1.msra.mxu0 0.0
      %2003 = vmatprep.mubr.f32.mxu0 0.0
      %2004 = vmatmul.mubr.f32.gmra.mrb[0].mxu0 %v1433
      %v2005 = vpop.f32.mrb[0].mxu0
      %v2006 = vadd.f32 0.0, %v2005
      %v2007 = vpop.f32.mrb[0].mxu0
      %2008 = vdwg.mxu0
      %v2010 = vrot.slane %v1574, 7
      %v2013 = vrot.slane %v1646, 6
      %v2016 = vrot.slane %v1718, 5
      %v2019 = vrot.slane %v1790, 4
      %v2022 = vrot.slane %v1862, 3
      %v2025 = vrot.slane %v1934, 2
      %v2028 = vrot.slane %v2006, 1
      %vm2030 = vcmask 1040384
      %v2031 = vsel %vm2030, %v1502, %v2010
      %vm2032 = vcmask 1041408
      %v2033 = vsel %vm2032, %v2031, %v2013
      %vm2034 = vcmask 1042432
      %v2035 = vsel %vm2034, %v2033, %v2016
      %vm2036 = vcmask 1043456
      %v2037 = vsel %vm2036, %v2035, %v2019
      %v2038 = vsel %vm520, %v2037, %v2022
      %vm2039 = vcmask 1045504
      %v2040 = vsel %vm2039, %v2038, %v2025
      %vm2041 = vcmask 1046528
      %v2042 = vsel %vm2041, %v2040, %v2028
      %v2043 = vld [vmem:[%s8] sm:$0xff]
      %v2044 = vadd.f32 %v2042, %v2043
      %2045 = vst.msk [vmem:[#allocation5] sm:$0xff] %vm644, 0.0
      %vm2046 = vcmask 519168
      %2047 = vst.msk [vmem:[#allocation5 + $0x8] sm:$0xf] %vm2046, 0.0
      %2048 = vst.msk [vmem:[#allocation5 + $0x2] sm:$0xff] %vm644, %v2044
      %v2049 = vld [vmem:[#allocation5] sm:$0xff]
      %v2050 = vld [vmem:[#allocation5 + $0x1] sm:$0xff]
      %v2051 = vld [vmem:[#allocation5 + $0x2] sm:$0xff]
      %v2052 = vld [vmem:[#allocation5 + $0x3] sm:$0xff]
      %v2053 = vld [vmem:[#allocation5 + $0x4] sm:$0xff]
      %2055 = vrot.lane.b32.xlu0 %v2050, 64
      %v2056 = vpop.permute.xlu0 %2055
      %2059 = vrot.lane.b32.xlu0 %v2052, 64
      %v2060 = vpop.permute.xlu0 %2059
      %v2062 = vsel %vm644, %v2049, %v2056
      %v2063 = vsel %vm644, %v2051, %v2060
      %v2064 = vld [vmem:[%s9] sm:$0xff]
      %v2065 = vld [vmem:[%s9 + $0x8] sm:$0xff]
      %v2066 = vld [vmem:[%s9 + $0x10] sm:$0xff]
      %v2067 = vld [vmem:[%s9 + $0x18] sm:$0xff]
      %v2068 = vld [vmem:[%s9 + $0x20] sm:$0xff]
      %v2069 = vld [vmem:[%s9 + $0x28] sm:$0xff]
      %v2070 = vld [vmem:[%s9 + $0x30] sm:$0xff]
      %v2071 = vld [vmem:[%s9 + $0x38] sm:$0xff]
      %v2072 = vld [vmem:[%s9 + $0x40] sm:$0xff]
      %v2073 = vld [vmem:[%s9 + $0x48] sm:$0xff]
      %v2074 = vld [vmem:[%s9 + $0x50] sm:$0xff]
      %v2075 = vld [vmem:[%s9 + $0x58] sm:$0xff]
      %v2076 = vld [vmem:[%s9 + $0x60] sm:$0xff]
      %v2077 = vld [vmem:[%s9 + $0x68] sm:$0xff]
      %v2078 = vld [vmem:[%s9 + $0x70] sm:$0xff]
      %v2079 = vld [vmem:[%s9 + $0x78] sm:$0xff]
      %v2080 = vld [vmem:[%s9 + $0x80] sm:$0xff]
      %v2081 = vld [vmem:[%s9 + $0x88] sm:$0xff]
      %v2082 = vld [vmem:[%s9 + $0x90] sm:$0xff]
      %v2083 = vld [vmem:[%s9 + $0x98] sm:$0xff]
      %v2084 = vld [vmem:[%s9 + $0xa0] sm:$0xff]
      %v2085 = vld [vmem:[%s9 + $0xa8] sm:$0xff]
      %v2086 = vld [vmem:[%s9 + $0xb0] sm:$0xff]
      %v2087 = vld [vmem:[%s9 + $0xb8] sm:$0xff]
      %v2088 = vld [vmem:[%s9 + $0xc0] sm:$0xff]
      %v2089 = vld [vmem:[%s9 + $0xc8] sm:$0xff]
      %v2090 = vld [vmem:[%s9 + $0xd0] sm:$0xff]
      %v2091 = vld [vmem:[%s9 + $0xd8] sm:$0xff]
      %v2092 = vld [vmem:[%s9 + $0xe0] sm:$0xff]
      %v2093 = vld [vmem:[%s9 + $0xe8] sm:$0xff]
      %v2094 = vld [vmem:[%s9 + $0xf0] sm:$0xff]
      %v2095 = vld [vmem:[%s9 + $0xf8] sm:$0xff]
      %v2096 = vld [vmem:[%s9 + $0x100] sm:$0xff]
      %v2097 = vld [vmem:[%s9 + $0x108] sm:$0xff]
      %v2098 = vld [vmem:[%s9 + $0x110] sm:$0xff]
      %v2099 = vld [vmem:[%s9 + $0x118] sm:$0xff]
      %v2100 = vld [vmem:[%s9 + $0x120] sm:$0xff]
      %v2101 = vld [vmem:[%s9 + $0x128] sm:$0xff]
      %v2102 = vld [vmem:[%s9 + $0x130] sm:$0xff]
      %v2103 = vld [vmem:[%s9 + $0x138] sm:$0xff]
      %v2104 = vld [vmem:[%s10] sm:$0x1]
      %v2106 = vlaneseq
      %v2107 = vshrl.u32 %v2106, 7
      %v2108 = vsub.s32 0, %v2107
      %v2109 = vrot.slane %v2104, %v2108
      %v2112 = vsel %vm644, %v2053, 0
      %2114 = vmatprep.subr.mxu0 0.0
      %2115 = vmatpush1.msra.mxu0 %v2064
      %2116 = vmatprep.subr.mxu0 0.0
      %2117 = vmatpush1.msra.mxu0 %v2065
      %2118 = vmatprep.subr.mxu0 0.0
      %2119 = vmatpush1.msra.mxu0 %v2066
      %2120 = vmatprep.subr.mxu0 0.0
      %2121 = vmatpush1.msra.mxu0 %v2067
      %2122 = vmatprep.subr.mxu0 0.0
      %2123 = vmatpush1.msra.mxu0 %v2068
      %2124 = vmatprep.subr.mxu0 0.0
      %2125 = vmatpush1.msra.mxu0 %v2069
      %2126 = vmatprep.subr.mxu0 0.0
      %2127 = vmatpush1.msra.mxu0 %v2070
      %2128 = vmatprep.subr.mxu0 0.0
      %2129 = vmatpush1.msra.mxu0 %v2071
      %2130 = vmatprep.subr.mxu0 0.0
      %2131 = vmatpush1.msra.mxu0 %v2072
      %2132 = vmatprep.subr.mxu0 0.0
      %2133 = vmatpush1.msra.mxu0 %v2073
      %2134 = vmatprep.subr.mxu0 0.0
      %2135 = vmatpush1.msra.mxu0 %v2074
      %2136 = vmatprep.subr.mxu0 0.0
      %2137 = vmatpush1.msra.mxu0 %v2075
      %2138 = vmatprep.subr.mxu0 0.0
      %2139 = vmatpush1.msra.mxu0 %v2076
      %2140 = vmatprep.subr.mxu0 0.0
      %2141 = vmatpush1.msra.mxu0 %v2077
      %2142 = vmatprep.subr.mxu0 0.0
      %2143 = vmatpush1.msra.mxu0 %v2078
      %2144 = vmatprep.subr.mxu0 0.0
      %2145 = vmatpush1.msra.mxu0 %v2079
      %2146 = vmatprep.subr.mxu0 0.0
      %2147 = vmatpush1.msra.mxu0 %v2080
      %2148 = vmatprep.subr.mxu0 0.0
      %2149 = vmatpush1.msra.mxu0 %v2081
      %2150 = vmatprep.subr.mxu0 0.0
      %2151 = vmatpush1.msra.mxu0 %v2082
      %2152 = vmatprep.subr.mxu0 0.0
      %2153 = vmatpush1.msra.mxu0 %v2083
      %2154 = vmatprep.subr.mxu0 0.0
      %2155 = vmatpush1.msra.mxu0 %v2084
      %2156 = vmatprep.subr.mxu0 0.0
      %2157 = vmatpush1.msra.mxu0 %v2085
      %2158 = vmatprep.subr.mxu0 0.0
      %2159 = vmatpush1.msra.mxu0 %v2086
      %2160 = vmatprep.subr.mxu0 0.0
      %2161 = vmatpush1.msra.mxu0 %v2087
      %2162 = vmatprep.subr.mxu0 0.0
      %2163 = vmatpush1.msra.mxu0 %v2088
      %2164 = vmatprep.subr.mxu0 0.0
      %2165 = vmatpush1.msra.mxu0 %v2089
      %2166 = vmatprep.subr.mxu0 0.0
      %2167 = vmatpush1.msra.mxu0 %v2090
      %2168 = vmatprep.subr.mxu0 0.0
      %2169 = vmatpush1.msra.mxu0 %v2091
      %2170 = vmatprep.subr.mxu0 0.0
      %2171 = vmatpush1.msra.mxu0 %v2092
      %2172 = vmatprep.subr.mxu0 0.0
      %2173 = vmatpush1.msra.mxu0 %v2093
      %2174 = vmatprep.subr.mxu0 0.0
      %2175 = vmatpush1.msra.mxu0 %v2094
      %2176 = vmatprep.subr.mxu0 0.0
      %2177 = vmatpush1.msra.mxu0 %v2095
      %2178 = vmatprep.mubr.f32.mxu0 %v2063
      %2179 = vmatmul.mubr.f32.gmra.mrb[0].mxu0 %v2062
      %v2180 = vpop.f32.mrb[0].mxu0
      %v2181 = vadd.f32 %v2109, %v2180
      %v2182 = vpop.f32.mrb[0].mxu0
      %2183 = vdwg.mxu0
      %2184 = vmatprep.subr.mxu0 0.0
      %2185 = vmatpush1.msra.mxu0 %v2096
      %2186 = vmatprep.subr.mxu0 0.0
      %2187 = vmatpush1.msra.mxu0 %v2097
      %2188 = vmatprep.subr.mxu0 0.0
      %2189 = vmatpush1.msra.mxu0 %v2098
      %2190 = vmatprep.subr.mxu0 0.0
      %2191 = vmatpush1.msra.mxu0 %v2099
      %2192 = vmatprep.subr.mxu0 0.0
      %2193 = vmatpush1.msra.mxu0 %v2100
      %2194 = vmatprep.subr.mxu0 0.0
      %2195 = vmatpush1.msra.mxu0 %v2101
      %2196 = vmatprep.subr.mxu0 0.0
      %2197 = vmatpush1.msra.mxu0 %v2102
      %2198 = vmatprep.subr.mxu0 0.0
      %2199 = vmatpush1.msra.mxu0 %v2103
      %2200 = vmatprep.subr.mxu0 0.0
      %2201 = vmatpush1.msra.mxu0 0.0
      %2202 = vmatprep.subr.mxu0 0.0
      %2203 = vmatpush1.msra.mxu0 0.0
      %2204 = vmatprep.subr.mxu0 0.0
      %2205 = vmatpush1.msra.mxu0 0.0
      %2206 = vmatprep.subr.mxu0 0.0
      %2207 = vmatpush1.msra.mxu0 0.0
      %2208 = vmatprep.subr.mxu0 0.0
      %2209 = vmatpush1.msra.mxu0 0.0
      %2210 = vmatprep.subr.mxu0 0.0
      %2211 = vmatpush1.msra.mxu0 0.0
      %2212 = vmatprep.subr.mxu0 0.0
      %2213 = vmatpush1.msra.mxu0 0.0
      %2214 = vmatprep.subr.mxu0 0.0
      %2215 = vmatpush1.msra.mxu0 0.0
      %2216 = vmatprep.subr.mxu0 0.0
      %2217 = vmatpush1.msra.mxu0 0.0
      %2218 = vmatprep.subr.mxu0 0.0
      %2219 = vmatpush1.msra.mxu0 0.0
      %2220 = vmatprep.subr.mxu0 0.0
      %2221 = vmatpush1.msra.mxu0 0.0
      %2222 = vmatprep.subr.mxu0 0.0
      %2223 = vmatpush1.msra.mxu0 0.0
      %2224 = vmatprep.subr.mxu0 0.0
      %2225 = vmatpush1.msra.mxu0 0.0
      %2226 = vmatprep.subr.mxu0 0.0
      %2227 = vmatpush1.msra.mxu0 0.0
      %2228 = vmatprep.subr.mxu0 0.0
      %2229 = vmatpush1.msra.mxu0 0.0
      %2230 = vmatprep.subr.mxu0 0.0
      %2231 = vmatpush1.msra.mxu0 0.0
      %2232 = vmatprep.subr.mxu0 0.0
      %2233 = vmatpush1.msra.mxu0 0.0
      %2234 = vmatprep.subr.mxu0 0.0
      %2235 = vmatpush1.msra.mxu0 0.0
      %2236 = vmatprep.subr.mxu0 0.0
      %2237 = vmatpush1.msra.mxu0 0.0
      %2238 = vmatprep.subr.mxu0 0.0
      %2239 = vmatpush1.msra.mxu0 0.0
      %2240 = vmatprep.subr.mxu0 0.0
      %2241 = vmatpush1.msra.mxu0 0.0
      %2242 = vmatprep.subr.mxu0 0.0
      %2243 = vmatpush1.msra.mxu0 0.0
      %2244 = vmatprep.subr.mxu0 0.0
      %2245 = vmatpush1.msra.mxu0 0.0
      %2246 = vmatprep.subr.mxu0 0.0
      %2247 = vmatpush1.msra.mxu0 0.0
      %2248 = vmatprep.mubr.f32.mxu0 0.0
      %2249 = vmatmul.mubr.f32.gmra.mrb[0].mxu0 %v2112
      %v2250 = vpop.f32.mrb[0].mxu0
      %v2251 = vadd.f32 %v2181, %v2250
      %v2252 = vpop.f32.mrb[0].mxu0
      %2253 = vdwg.mxu0
      %v2254 = vmax.f32 %v2251, 0.0
      %2255 = vst.msk [vmem:[#allocation6] sm:$0xff] %vm601, 0.0
      %2256 = vst.msk [vmem:[#allocation6 + $0x8] sm:$0xff] %vm601, 0.0
      %2257 = vst.msk [vmem:[#allocation6 + $0x10] sm:$0xf] %vm604, 0.0
      %s2258 = scalar_lea.vmem [#allocation6], 2
      %2259 = vst [vmem:[%s2258] ss:$2 sm:$0xff] %v2254
      %s2260 = scalar_lea.vmem [#allocation6], 3
      %2261 = vst [vmem:[%s2260] ss:$2 sm:$0xff] %v2254
      %v2262 = vld [vmem:[#allocation6] sm:$0xff]
      %v2263 = vld [vmem:[#allocation6 + $0x8] sm:$0xff]
      %v2264 = vld [vmem:[#allocation6 + $0x1] sm:$0xff]
      %v2265 = vld [vmem:[#allocation6 + $0x9] sm:$0xff]
      %v2266 = vld [vmem:[#allocation6 + $0x2] sm:$0xff]
      %v2267 = vld [vmem:[#allocation6 + $0xa] sm:$0xff]
      %v2268 = vld [vmem:[#allocation6 + $0x3] sm:$0xff]
      %v2269 = vld [vmem:[#allocation6 + $0xb] sm:$0xff]
      %v2270 = vld [vmem:[#allocation6 + $0x4] sm:$0xff]
      %v2271 = vld [vmem:[#allocation6 + $0xc] sm:$0xff]
      %2274 = vrot.lane.b32.xlu0 %v2264, 32
      %v2275 = vpop.permute.xlu0 %2274
      %2276 = vrot.lane.b32.xlu0 %v2265, 32
      %v2277 = vpop.permute.xlu0 %2276
      %2282 = vrot.lane.b32.xlu0 %v2266, 64
      %v2283 = vpop.permute.xlu0 %2282
      %2284 = vrot.lane.b32.xlu0 %v2267, 64
      %v2285 = vpop.permute.xlu0 %2284
      %2290 = vrot.lane.b32.xlu0 %v2268, 96
      %v2291 = vpop.permute.xlu0 %2290
      %2292 = vrot.lane.b32.xlu0 %v2269, 96
      %v2293 = vpop.permute.xlu0 %2292
      %v2296 = vsel %vm601, %v2262, %v2275
      %v2297 = vsel %vm601, %v2263, %v2277
      %v2298 = vsel %vm644, %v2296, %v2283
      %v2299 = vsel %vm644, %v2297, %v2285
      %v2300 = vsel %vm647, %v2298, %v2291
      %v2301 = vsel %vm647, %v2299, %v2293
      %v2302 = vld [vmem:[%s11] sm:$0xff]
      %v2303 = vld [vmem:[%s11 + $0x8] sm:$0xff]
      %v2304 = vld [vmem:[%s11 + $0x10] sm:$0xff]
      %v2305 = vld [vmem:[%s11 + $0x18] sm:$0xff]
      %v2306 = vld [vmem:[%s11 + $0x20] sm:$0xff]
      %v2307 = vld [vmem:[%s11 + $0x28] sm:$0xff]
      %v2308 = vld [vmem:[%s11 + $0x30] sm:$0xff]
      %v2309 = vld [vmem:[%s11 + $0x38] sm:$0xff]
      %v2310 = vld [vmem:[%s11 + $0x40] sm:$0xff]
      %v2311 = vld [vmem:[%s11 + $0x48] sm:$0xff]
      %v2312 = vld [vmem:[%s11 + $0x50] sm:$0xff]
      %v2313 = vld [vmem:[%s11 + $0x58] sm:$0xff]
      %v2314 = vld [vmem:[%s11 + $0x60] sm:$0xff]
      %v2315 = vld [vmem:[%s11 + $0x68] sm:$0xff]
      %v2316 = vld [vmem:[%s11 + $0x70] sm:$0xff]
      %v2317 = vld [vmem:[%s11 + $0x78] sm:$0xff]
      %v2318 = vld [vmem:[%s11 + $0x80] sm:$0xff]
      %v2319 = vld [vmem:[%s11 + $0x88] sm:$0xff]
      %v2320 = vld [vmem:[%s11 + $0x90] sm:$0xff]
      %v2321 = vld [vmem:[%s11 + $0x98] sm:$0xff]
      %v2322 = vld [vmem:[#allocation7] sm:$0x1]
      %v2324 = vlaneseq
      %v2325 = vshrl.u32 %v2324, 7
      %v2326 = vsub.s32 0, %v2325
      %v2327 = vrot.slane %v2322, %v2326
      %v2330 = vsel %vm601, %v2270, 0
      %v2333 = vsel %vm601, %v2271, 0
      %2335 = vmatprep.subr.mxu0 0.0
      %2336 = vmatpush1.msra.mxu0 %v2302
      %2337 = vmatprep.subr.mxu0 0.0
      %2338 = vmatpush1.msra.mxu0 %v2303
      %2339 = vmatprep.subr.mxu0 0.0
      %2340 = vmatpush1.msra.mxu0 %v2304
      %2341 = vmatprep.subr.mxu0 0.0
      %2342 = vmatpush1.msra.mxu0 %v2305
      %2343 = vmatprep.subr.mxu0 0.0
      %2344 = vmatpush1.msra.mxu0 %v2306
      %2345 = vmatprep.subr.mxu0 0.0
      %2346 = vmatpush1.msra.mxu0 %v2307
      %2347 = vmatprep.subr.mxu0 0.0
      %2348 = vmatpush1.msra.mxu0 %v2308
      %2349 = vmatprep.subr.mxu0 0.0
      %2350 = vmatpush1.msra.mxu0 %v2309
      %2351 = vmatprep.subr.mxu0 0.0
      %2352 = vmatpush1.msra.mxu0 %v2310
      %2353 = vmatprep.subr.mxu0 0.0
      %2354 = vmatpush1.msra.mxu0 %v2311
      %2355 = vmatprep.subr.mxu0 0.0
      %2356 = vmatpush1.msra.mxu0 %v2312
      %2357 = vmatprep.subr.mxu0 0.0
      %2358 = vmatpush1.msra.mxu0 %v2313
      %2359 = vmatprep.subr.mxu0 0.0
      %2360 = vmatpush1.msra.mxu0 %v2314
      %2361 = vmatprep.subr.mxu0 0.0
      %2362 = vmatpush1.msra.mxu0 %v2315
      %2363 = vmatprep.subr.mxu0 0.0
      %2364 = vmatpush1.msra.mxu0 %v2316
      %2365 = vmatprep.subr.mxu0 0.0
      %2366 = vmatpush1.msra.mxu0 %v2317
      %2367 = vmatprep.subr.mxu0 0.0
      %2368 = vmatpush1.msra.mxu0 %v2318
      %2369 = vmatprep.subr.mxu0 0.0
      %2370 = vmatpush1.msra.mxu0 %v2319
      %2371 = vmatprep.subr.mxu0 0.0
      %2372 = vmatpush1.msra.mxu0 %v2320
      %2373 = vmatprep.subr.mxu0 0.0
      %2374 = vmatpush1.msra.mxu0 %v2321
      %2375 = vmatprep.subr.mxu0 0.0
      %2376 = vmatpush1.msra.mxu0 0.0
      %2377 = vmatprep.subr.mxu0 0.0
      %2378 = vmatpush1.msra.mxu0 0.0
      %2379 = vmatprep.subr.mxu0 0.0
      %2380 = vmatpush1.msra.mxu0 0.0
      %2381 = vmatprep.subr.mxu0 0.0
      %2382 = vmatpush1.msra.mxu0 0.0
      %2383 = vmatprep.subr.mxu0 0.0
      %2384 = vmatpush1.msra.mxu0 0.0
      %2385 = vmatprep.subr.mxu0 0.0
      %2386 = vmatpush1.msra.mxu0 0.0
      %2387 = vmatprep.subr.mxu0 0.0
      %2388 = vmatpush1.msra.mxu0 0.0
      %2389 = vmatprep.subr.mxu0 0.0
      %2390 = vmatpush1.msra.mxu0 0.0
      %2391 = vmatprep.subr.mxu0 0.0
      %2392 = vmatpush1.msra.mxu0 0.0
      %2393 = vmatprep.subr.mxu0 0.0
      %2394 = vmatpush1.msra.mxu0 0.0
      %2395 = vmatprep.subr.mxu0 0.0
      %2396 = vmatpush1.msra.mxu0 0.0
      %2397 = vmatprep.subr.mxu0 0.0
      %2398 = vmatpush1.msra.mxu0 0.0
      %2399 = vmatprep.mubr.f32.mxu0 %v2330
      %2400 = vmatmul.mubr.f32.gmra.mrb[0].mxu0 %v2300
      %v2401 = vpop.f32.mrb[0].mxu0
      %v2402 = vadd.f32 %v2327, %v2401
      %v2403 = vpop.f32.mrb[0].mxu0
      %2404 = vmatprep.mubr.f32.mxu0 %v2333
      %2405 = vmatmul.mubr.f32.gmra.mrb[0].mxu0 %v2301
      %v2406 = vpop.f32.mrb[0].mxu0
      %v2407 = vadd.f32 %v2327, %v2406
      %v2408 = vpop.f32.mrb[0].mxu0
      %2409 = vdwg.mxu0
      %v2410 = vxor.u32 %v2402, 2147483648
      %v2411 = vxor.u32 %v2407, 2147483648
      %v2412 = vmul.f32 %v2410, 1.442695
      %v2413 = vpow.pop %v2412
      %v2414 = vmul.f32 %v2411, 1.442695
      %v2415 = vpow.pop %v2414
      %v2416 = vadd.f32 %v2413, 1.0
      %v2417 = vadd.f32 %v2415, 1.0
      %v2418 = vrcp.pop %v2416
      %v2419 = vmul.f32 1.0, %v2418
      %v2420 = vrcp.pop %v2417
      %v2421 = vmul.f32 1.0, %v2420
      %2422 = vst.msk [vmem:[%s442] sm:$0xff] %vm443, %v2419
      %2423 = vst.msk [vmem:[%s442 + $0x8] sm:$0xff] %vm443, %v2421
      %p2424 = scmp.lt.s32.totalorder %s26, 1
      %s2425 = scalar_select %p2424, %s26, 1
      %s2426 = smul.addr %s2425, 2
      %s2427 = smul.addr %s2426, 8
      %s2428 = scalar_lea.vmem %s13, %s2427
      // Predicated region
      $region73: #{gencoder_autoencoder_forward.1} parent=71 // pred_check
        %p2429 = pneg %p322
      $region74: #{gencoder_autoencoder_forward.1} parent=71 // pred_check_branch
        %2431 = sbr.rel (%p2429) target = $region76
      $region75: #{gencoder_autoencoder_forward.1} parent=71 // pred_region
        _
      $region76: #{gencoder_autoencoder_forward.1} parent=71 // pred_fallthru
        _
    $region72: #{gencoder_autoencoder_forward.1} parent=5 // pred_fallthru
      _
    %p2432 = scmp.le.s32.totalorder 2, %s21
    // Predicated region
    $region77: #{gencoder_autoencoder_forward.1} parent=5 // pred_check
      %p2433 = pneg %p2432
    $region78: #{gencoder_autoencoder_forward.1} parent=5 // pred_check_branch
      %2435 = sbr.rel (%p2433) target = $region80
    $region79: #{gencoder_autoencoder_forward.1} parent=5 // pred_region
      %s2436 = ssub.s32 %s21, 2
      // Predicated region
      $region81: #{gencoder_autoencoder_forward.1} parent=79 // pred_check
        %p2437 = pneg %p328
      $region82: #{gencoder_autoencoder_forward.1} parent=79 // pred_check_branch
        %2439 = sbr.rel (%p2437) target = $region84
      $region83: #{gencoder_autoencoder_forward.1} parent=79 // pred_region
        %p2440 = scmp.lt.s32.totalorder %s27, 1
        %s2441 = scalar_select %p2440, %s27, 1
        %s2442 = smul.addr %s2441, 2
        %s2443 = smul.addr %s2442, 8
        %s2444 = scalar_lea.vmem %s13, %s2443
      $region84: #{gencoder_autoencoder_forward.1} parent=79 // pred_fallthru
        _
    $region80: #{gencoder_autoencoder_forward.1} parent=5 // pred_fallthru
      _
  $region6: #{gencoder_autoencoder_forward.1} parent=0 // loop_footer
    %s25 = sadd.s32 1, %s21
  $region7: #{gencoder_autoencoder_forward.1} parent=0 // loop_footer_branch
    %20 = sbr.rel target = $region3
  $region8: #{gencoder_autoencoder_forward.1} parent=0 // loop_exit
    _

</llo_original>
